<compile_context>
chip_gen: v7x
topology: tpu7x:2x2x1
jax: 0.10.0
libtpu: 0.0.40
codegen_flags: <defaults>
</compile_context>

<pallas_src>
import jax
import jax.numpy as jnp
from jax.experimental import pallas as pl
from jax.experimental.pallas import tpu as pltpu

NUM_CLASSES = 100   # module default num_classs=100
IN_FEATURES = 1920  # densenet201 feature channels
POOL = 7            # avgpool_size when input_size == 224
LANE = 128


def _head_kernel(feat_ref, w_ref, b_ref, out_ref):
    """Fused ReLU -> global average pool -> Linear.

    feat_ref: (TB, S, C) f32, channels-last (C in the lane axis)
    w_ref:    (C, N_pad) bf16, classifier weight pre-transposed, pool-scale folded in
    b_ref:    (1, N_pad) f32, padded classifier bias
    out_ref:  (TB, N_pad) f32 logits
    """
    # ReLU on the VPU, then pool over the spatial axis (sublanes -> cheap
    # vreg adds + a 3-step sublane reduce per 128-lane column group).
    f = jnp.maximum(feat_ref[...], 0.0)                     # (TB, S, C) f32
    pooled = jnp.sum(f, axis=1)                             # (TB, C) f32, C in lanes
    # (TB, C) @ (C, N_pad): plain (M,K)@(K,N) MXU matmul, f32 accumulation.
    # The 1/49 average scale is already folded into w_ref.
    logits = jnp.dot(pooled.astype(jnp.bfloat16), w_ref[...],
                     preferred_element_type=jnp.float32)    # (TB, N_pad)
    out_ref[...] = logits + b_ref[...]


def prepare_classifier_params(w, b, pool_area=POOL * POOL):
    """One-time preprocessing of nn.Linear(1920, num_classes) parameters.

    * pads the class dimension to a multiple of 128 (lane-dense MXU columns),
    * transposes to (C, N_pad) so the kernel does a plain (M,K)@(K,N) matmul
      with no in-kernel relayout,
    * folds the 1/pool_area average-pool scale into the weight,
    * casts the weight to bf16 (bias stays f32).
    """
    n, c = w.shape
    n_pad = int(pl.cdiv(n, LANE)) * LANE
    w_scaled = (w.astype(jnp.float32) * (1.0 / float(pool_area))).astype(jnp.bfloat16)
    w_p = jnp.zeros((c, n_pad), jnp.bfloat16).at[:, :n].set(w_scaled.T)
    b_p = jnp.zeros((1, n_pad), jnp.float32).at[0, :n].set(b.astype(jnp.float32))
    return w_p, b_p


def _tile_config(batch):
    """Per-generation batch tile + VMEM limit.

    Double-buffered f32 feature tiles cost ~2 * TB * 56(=49 padded) * 1920 * 4 B
    (+ ~1 MiB of weights).  v7x has 64 MiB VMEM per TensorCore, v5e/v6e 128 MiB.
    """
    try:
        info = pltpu.get_tpu_info()
        vmem_phys = int(getattr(info, "vmem_capacity_bytes", 64 << 20))
    except Exception:
        vmem_phys = 64 << 20          # conservative (v7x-sized) fallback
    if vmem_phys >= (100 << 20):      # v5e / v6e: 128 MiB physical
        tb_max, vmem_limit = 64, 96 << 20
    else:                             # v7x: 64 MiB physical
        tb_max, vmem_limit = 32, 48 << 20
    tb = batch if batch <= tb_max else tb_max   # tb_max is a multiple of 8
    return tb, vmem_limit


def modified_densenet201_head(features_nhwc, w_prep, b_prep, num_classes=NUM_CLASSES):
    """Pallas implementation of Modified_densenet201.forward's head.

    features_nhwc: (B, H, W, C=1920) float32 channels-last feature map, as a
                   native JAX/NHWC feature extractor emits it.  (A PyTorch NCHW
                   tensor would need one transpose outside this function.)
    w_prep: (1920, N_pad) bf16   from prepare_classifier_params
    b_prep: (1, N_pad)    f32    from prepare_classifier_params
    returns: (B, num_classes) float32 logits
    """
    B, H, W, C = features_nhwc.shape
    S = H * W
    N_pad = w_prep.shape[1]

    feat = features_nhwc.reshape(B, S, C)   # contiguous reshape: free, no transpose

    TB, vmem_limit = _tile_config(B)
    grid = (pl.cdiv(B, TB),)

    # The head is HBM-bound: tell XLA so it schedules/overlaps accordingly.
    cost = pl.CostEstimate(
        flops=2 * B * C * N_pad + B * S * C,
        transcendentals=0,
        bytes_accessed=B * S * C * 4 + C * N_pad * 2 + N_pad * 4 + B * N_pad * 4,
    )

    out = pl.pallas_call(
        _head_kernel,
        out_shape=jax.ShapeDtypeStruct((B, N_pad), jnp.float32),
        grid=grid,
        in_specs=[
            pl.BlockSpec((TB, S, C), lambda i: (i, 0, 0)),    # batch-tiled features
            pl.BlockSpec((C, N_pad), lambda i: (0, 0)),       # constant block -> fetched once
            pl.BlockSpec((1, N_pad), lambda i: (0, 0)),       # constant block -> fetched once
        ],
        out_specs=pl.BlockSpec((TB, N_pad), lambda i: (i, 0)),
        compiler_params=pltpu.CompilerParams(
            dimension_semantics=("parallel",),                # shard batch across TCs (v7x)
            vmem_limit_bytes=vmem_limit,
        ),
        cost_estimate=cost,
    )(feat, w_prep, b_prep)

    # Keep module semantics: return exactly (B, num_classes).
    return out[:, :num_classes]


def _reference_head(features_nhwc, w, b):
    f = jnp.maximum(features_nhwc, 0.0)
    pooled = jnp.mean(f, axis=(1, 2))   # avg_pool2d(kernel_size=7) on a 7x7 map
    return pooled @ w.T + b


if __name__ == "__main__":
    key = jax.random.PRNGKey(0)
    k_feat, k_w, k_b = jax.random.split(key, 3)

    batch = 2
    # TODO(synk): densenet201.features (the ~700-layer pretrained conv trunk) is
    # not re-implemented; its (B, 7, 7, 1920) output is synthesized here.  A JAX
    # feature extractor is natively NHWC, so the head consumes channels-last
    # features directly and no NCHW->NHWC transpose is ever materialized.
    features = jax.random.normal(
        k_feat, (batch, POOL, POOL, IN_FEATURES), jnp.float32)

    # nn.Linear(in_features=1920, out_features=num_classs) parameters,
    # deterministic synthetic init (no checkpoint loading).
    w = jax.random.normal(k_w, (NUM_CLASSES, IN_FEATURES), jnp.float32) * 0.02
    b = jax.random.normal(k_b, (NUM_CLASSES,), jnp.float32) * 0.02

    # One-time parameter prep (pad classes to 128, transpose to (C, N_pad),
    # fold 1/49 pool scale, cast bf16) -- hoisted out of the per-call path.
    w_prep, b_prep = prepare_classifier_params(w, b)

    out = jax.block_until_ready(
        modified_densenet201_head(features, w_prep, b_prep, NUM_CLASSES))

    ref = _reference_head(features, w, b)
    assert out.shape == (batch, NUM_CLASSES)
    max_err = float(jnp.max(jnp.abs(out - ref)))
    # f32 features/pool; only the weight + pooled MXU inputs are bf16.
    assert jnp.allclose(out, ref, atol=5e-2, rtol=5e-2), (
        "max abs err = %f" % max_err)

    print("KERNEL_OK")
</pallas_src>

<mosaic_0001>
module attributes {stable_mosaic.version = 11 : i64} {
  func.func @_head_kernel(%arg0: i32, %arg1: memref<2x49x1920xf32, #tpu.memory_space<vmem>>, %arg2: memref<1920x128xbf16, #tpu.memory_space<vmem>>, %arg3: memref<1x128xf32, #tpu.memory_space<vmem>>, %arg4: memref<2x128xf32, #tpu.memory_space<vmem>>) attributes {dimension_semantics = [#tpu.dimension_semantics<parallel>], iteration_bounds = array<i64: 1>, scalar_prefetch = 0 : i64, scratch_operands = 0 : i64, tpu.core_type = #tpu.core_type<tc>, window_params = [{transform_indices = @transform_0, window_bounds = array<i64: 2, 49, 1920>}, {pipeline_mode = #tpu.pipeline_mode<synchronous>, transform_indices = @transform_1, window_bounds = array<i64: 1920, 128>}, {pipeline_mode = #tpu.pipeline_mode<synchronous>, transform_indices = @transform_2, window_bounds = array<i64: 1, 128>}, {transform_indices = @transform_3, window_bounds = array<i64: 2, 128>}]} {
    %c0 = arith.constant 0 : index
    %c0_0 = arith.constant 0 : index
    %c0_1 = arith.constant 0 : index
    %0 = vector.load %arg1[%c0, %c0_0, %c0_1] : memref<2x49x1920xf32, #tpu.memory_space<vmem>>, vector<2x49x1920xf32>
    %cst = arith.constant 0.000000e+00 : f32
    %1 = vector.broadcast %cst : f32 to vector<2x49x1920xf32>
    %2 = arith.maximumf %0, %1 : vector<2x49x1920xf32>
    %cst_2 = arith.constant dense<0.000000e+00> : vector<2x1920xf32>
    %3 = vector.multi_reduction <add>, %2, %cst_2 [1] : vector<2x49x1920xf32> to vector<2x1920xf32>
    %4 = arith.truncf %3 : vector<2x1920xf32> to vector<2x1920xbf16>
    %c0_3 = arith.constant 0 : index
    %c0_4 = arith.constant 0 : index
    %5 = vector.load %arg2[%c0_3, %c0_4] : memref<1920x128xbf16, #tpu.memory_space<vmem>>, vector<1920x128xbf16>
    %cst_5 = arith.constant dense<0.000000e+00> : vector<2x128xf32>
    %6 = tpu.matmul %4, %5, %cst_5 {dimension_numbers = #tpu.dot_dimension_numbers<[1], [0], [0], [1], [0, 0, 1, 1], [], []>} : vector<2x1920xbf16>, vector<1920x128xbf16>, vector<2x128xf32> -> vector<2x128xf32>
    %c0_6 = arith.constant 0 : index
    %c0_7 = arith.constant 0 : index
    %7 = vector.load %arg3[%c0_6, %c0_7] : memref<1x128xf32, #tpu.memory_space<vmem>>, vector<1x128xf32>
    %8 = vector.broadcast %7 : vector<1x128xf32> to vector<2x128xf32>
    %9 = arith.addf %6, %8 : vector<2x128xf32>
    %c0_8 = arith.constant 0 : index
    %c0_9 = arith.constant 0 : index
    %10 = vector.load %arg4[%c0_8, %c0_9] : memref<2x128xf32, #tpu.memory_space<vmem>>, vector<2x128xf32>
    tpu.vector_store %arg4[%c0_8, %c0_9], %9 {strides = array<i32>} : memref<2x128xf32, #tpu.memory_space<vmem>>, vector<2x128xf32>,
    return
  }
  func.func @transform_0(%arg0: i32) -> (i32, i32, i32) {
    %c0_i32 = arith.constant 0 : i32
    %c0_i32_0 = arith.constant 0 : i32
    %c0_i32_1 = arith.constant 0 : i32
    return %arg0, %c0_i32, %c0_i32_0 : i32, i32, i32
  }
  func.func @transform_1(%arg0: i32) -> (i32, i32) {
    %c0_i32 = arith.constant 0 : i32
    %c0_i32_0 = arith.constant 0 : i32
    %c0_i32_1 = arith.constant 0 : i32
    return %c0_i32, %c0_i32_0 : i32, i32
  }
  func.func @transform_2(%arg0: i32) -> (i32, i32) {
    %c0_i32 = arith.constant 0 : i32
    %c0_i32_0 = arith.constant 0 : i32
    %c0_i32_1 = arith.constant 0 : i32
    return %c0_i32, %c0_i32_0 : i32, i32
  }
  func.func @transform_3(%arg0: i32) -> (i32, i32) {
    %c0_i32 = arith.constant 0 : i32
    %c0_i32_0 = arith.constant 0 : i32
    return %arg0, %c0_i32 : i32, i32
  }
}

</mosaic_0001>

<llo_original>
// kernel: tpu_custom_call.1
$region0: #{tpu_custom_call.1}
  #allocation0 [shape = 'u32[]', space=smem, size = 0x4, offset = 0x4, fixed_abs, tag = 'smem constant byte address 0x4 - core index']
  #allocation1 [shape = 'u32[144,128]{1,0:T(1,128)}', space=vmem, size = 0x12000, scoped, tag = 'internal scratch']
  %s0 = inlined_call_operand.vmem [shape: f32[2,49,1920], index: 0, kind: input, shape index: {}]
  %s1 = inlined_call_operand.vmem [shape: bf16[1920,128], index: 1, kind: input, shape index: {}]
  %s2 = inlined_call_operand.vmem [shape: f32[1,128], index: 2, kind: input, shape index: {}]
  %s3 = inlined_call_operand.hbm [shape: f32[2,128], index: 3, kind: output, shape index: {}]
  %s4 = sld [smem:[#allocation0]]
  $region22: #{tpu_custom_call.1} parent=0
    _
  %s6 = ssub.s32 1, %s4
  %s7 = scalar_select 0, %s6, %s4
  $region1: #{tpu_custom_call.1} parent=0
    #allocation2 [shape = 'u8[1024]{0}', space=vmem, size = 0x400, scoped, tag = 'output window, operand 0, single buffered']
    #allocation3 [shape = 's32[1]{0}', space=sflag, size = 0x4, scoped, tag = 'scoped memory for tpu_custom_call.1']
    %8 = vsyncpa [#allocation3], 0
    // Predicated region
    $region2: #{tpu_custom_call.1} parent=1 // pred_check
      _
    $region3: #{tpu_custom_call.1} parent=1 // pred_check_branch
      %10 = sbr.rel (0) target = $region5
    $region4: #{tpu_custom_call.1} parent=1 // pred_region
      _
    $region5: #{tpu_custom_call.1} parent=1 // pred_fallthru
      _
    // Predicated region
    $region6: #{tpu_custom_call.1} parent=1 // pred_check
      _
    $region7: #{tpu_custom_call.1} parent=1 // pred_check_branch
      %12 = sbr.rel (0) target = $region9
    $region8: #{tpu_custom_call.1} parent=1 // pred_region
      _
    $region9: #{tpu_custom_call.1} parent=1 // pred_fallthru
      _
    // Predicated region
    $region10: #{tpu_custom_call.1} parent=1 // pred_check
      _
    $region11: #{tpu_custom_call.1} parent=1 // pred_check_branch
      %14 = sbr.rel (0) target = $region13
    $region12: #{tpu_custom_call.1} parent=1 // pred_region
      _
    $region13: #{tpu_custom_call.1} parent=1 // pred_fallthru
      _
    %v16 = vld [vmem:[%s0] sm:$0xff]
    %v17 = vld [vmem:[%s0 + $0x8] sm:$0xff]
    %v18 = vld [vmem:[%s0 + $0x10] sm:$0xff]
    %v19 = vld [vmem:[%s0 + $0x18] sm:$0xff]
    %v20 = vld [vmem:[%s0 + $0x20] sm:$0xff]
    %v21 = vld [vmem:[%s0 + $0x28] sm:$0xff]
    %v22 = vld [vmem:[%s0 + $0x30] sm:$0xff]
    %v23 = vld [vmem:[%s0 + $0x38] sm:$0xff]
    %v24 = vld [vmem:[%s0 + $0x40] sm:$0xff]
    %v25 = vld [vmem:[%s0 + $0x48] sm:$0xff]
    %v26 = vld [vmem:[%s0 + $0x50] sm:$0xff]
    %v27 = vld [vmem:[%s0 + $0x58] sm:$0xff]
    %v28 = vld [vmem:[%s0 + $0x60] sm:$0xff]
    %v29 = vld [vmem:[%s0 + $0x68] sm:$0xff]
    %v30 = vld [vmem:[%s0 + $0x70] sm:$0xff]
    %v31 = vld [vmem:[%s0 + $0x78] sm:$0xff]
    %v32 = vld [vmem:[%s0 + $0x80] sm:$0xff]
    %v33 = vld [vmem:[%s0 + $0x88] sm:$0xff]
    %v34 = vld [vmem:[%s0 + $0x90] sm:$0xff]
    %v35 = vld [vmem:[%s0 + $0x98] sm:$0xff]
    %v36 = vld [vmem:[%s0 + $0xa0] sm:$0xff]
    %v37 = vld [vmem:[%s0 + $0xa8] sm:$0xff]
    %v38 = vld [vmem:[%s0 + $0xb0] sm:$0xff]
    %v39 = vld [vmem:[%s0 + $0xb8] sm:$0xff]
    %v40 = vld [vmem:[%s0 + $0xc0] sm:$0xff]
    %v41 = vld [vmem:[%s0 + $0xc8] sm:$0xff]
    %v42 = vld [vmem:[%s0 + $0xd0] sm:$0xff]
    %v43 = vld [vmem:[%s0 + $0xd8] sm:$0xff]
    %v44 = vld [vmem:[%s0 + $0xe0] sm:$0xff]
    %v45 = vld [vmem:[%s0 + $0xe8] sm:$0xff]
    %v46 = vld [vmem:[%s0 + $0xf0] sm:$0xff]
    %v47 = vld [vmem:[%s0 + $0xf8] sm:$0xff]
    %v48 = vld [vmem:[%s0 + $0x100] sm:$0xff]
    %v49 = vld [vmem:[%s0 + $0x108] sm:$0xff]
    %v50 = vld [vmem:[%s0 + $0x110] sm:$0xff]
    %v51 = vld [vmem:[%s0 + $0x118] sm:$0xff]
    %v52 = vld [vmem:[%s0 + $0x120] sm:$0xff]
    %v53 = vld [vmem:[%s0 + $0x128] sm:$0xff]
    %v54 = vld [vmem:[%s0 + $0x130] sm:$0xff]
    %v55 = vld [vmem:[%s0 + $0x138] sm:$0xff]
    %v56 = vld [vmem:[%s0 + $0x140] sm:$0xff]
    %v57 = vld [vmem:[%s0 + $0x148] sm:$0xff]
    %v58 = vld [vmem:[%s0 + $0x150] sm:$0xff]
    %v59 = vld [vmem:[%s0 + $0x158] sm:$0xff]
    %v60 = vld [vmem:[%s0 + $0x160] sm:$0xff]
    %v61 = vld [vmem:[%s0 + $0x168] sm:$0xff]
    %v62 = vld [vmem:[%s0 + $0x170] sm:$0xff]
    %v63 = vld [vmem:[%s0 + $0x178] sm:$0xff]
    %v64 = vld [vmem:[%s0 + $0x180] sm:$0xff]
    %v65 = vld [vmem:[%s0 + $0x188] sm:$0xff]
    %v66 = vld [vmem:[%s0 + $0x190] sm:$0xff]
    %v67 = vld [vmem:[%s0 + $0x198] sm:$0xff]
    %v68 = vld [vmem:[%s0 + $0x1a0] sm:$0xff]
    %v69 = vld [vmem:[%s0 + $0x1a8] sm:$0xff]
    %v70 = vld [vmem:[%s0 + $0x1b0] sm:$0xff]
    %v71 = vld [vmem:[%s0 + $0x1b8] sm:$0xff]
    %v72 = vld [vmem:[%s0 + $0x1c0] sm:$0xff]
    %v73 = vld [vmem:[%s0 + $0x1c8] sm:$0xff]
    %v74 = vld [vmem:[%s0 + $0x1d0] sm:$0xff]
    %v75 = vld [vmem:[%s0 + $0x1d8] sm:$0xff]
    %v76 = vld [vmem:[%s0 + $0x1e0] sm:$0xff]
    %v77 = vld [vmem:[%s0 + $0x1e8] sm:$0xff]
    %v78 = vld [vmem:[%s0 + $0x1f0] sm:$0xff]
    %v79 = vld [vmem:[%s0 + $0x1f8] sm:$0xff]
    %v80 = vld [vmem:[%s0 + $0x200] sm:$0xff]
    %v81 = vld [vmem:[%s0 + $0x208] sm:$0xff]
    %v82 = vld [vmem:[%s0 + $0x210] sm:$0xff]
    %v83 = vld [vmem:[%s0 + $0x218] sm:$0xff]
    %v84 = vld [vmem:[%s0 + $0x220] sm:$0xff]
    %v85 = vld [vmem:[%s0 + $0x228] sm:$0xff]
    %v86 = vld [vmem:[%s0 + $0x230] sm:$0xff]
    %v87 = vld [vmem:[%s0 + $0x238] sm:$0xff]
    %v88 = vld [vmem:[%s0 + $0x240] sm:$0xff]
    %v89 = vld [vmem:[%s0 + $0x248] sm:$0xff]
    %v90 = vld [vmem:[%s0 + $0x250] sm:$0xff]
    %v91 = vld [vmem:[%s0 + $0x258] sm:$0xff]
    %v92 = vld [vmem:[%s0 + $0x260] sm:$0xff]
    %v93 = vld [vmem:[%s0 + $0x268] sm:$0xff]
    %v94 = vld [vmem:[%s0 + $0x270] sm:$0xff]
    %v95 = vld [vmem:[%s0 + $0x278] sm:$0xff]
    %v96 = vld [vmem:[%s0 + $0x280] sm:$0xff]
    %v97 = vld [vmem:[%s0 + $0x288] sm:$0xff]
    %v98 = vld [vmem:[%s0 + $0x290] sm:$0xff]
    %v99 = vld [vmem:[%s0 + $0x298] sm:$0xff]
    %v100 = vld [vmem:[%s0 + $0x2a0] sm:$0xff]
    %v101 = vld [vmem:[%s0 + $0x2a8] sm:$0xff]
    %v102 = vld [vmem:[%s0 + $0x2b0] sm:$0xff]
    %v103 = vld [vmem:[%s0 + $0x2b8] sm:$0xff]
    %v104 = vld [vmem:[%s0 + $0x2c0] sm:$0xff]
    %v105 = vld [vmem:[%s0 + $0x2c8] sm:$0xff]
    %v106 = vld [vmem:[%s0 + $0x2d0] sm:$0x1]
    %v107 = vld [vmem:[%s0 + $0x2d8] sm:$0x1]
    %v108 = vld [vmem:[%s0 + $0x2e0] sm:$0x1]
    %v109 = vld [vmem:[%s0 + $0x2e8] sm:$0x1]
    %v110 = vld [vmem:[%s0 + $0x2f0] sm:$0x1]
    %v111 = vld [vmem:[%s0 + $0x2f8] sm:$0x1]
    %v112 = vld [vmem:[%s0 + $0x300] sm:$0x1]
    %v113 = vld [vmem:[%s0 + $0x308] sm:$0x1]
    %v114 = vld [vmem:[%s0 + $0x310] sm:$0x1]
    %v115 = vld [vmem:[%s0 + $0x318] sm:$0x1]
    %v116 = vld [vmem:[%s0 + $0x320] sm:$0x1]
    %v117 = vld [vmem:[%s0 + $0x328] sm:$0x1]
    %v118 = vld [vmem:[%s0 + $0x330] sm:$0x1]
    %v119 = vld [vmem:[%s0 + $0x338] sm:$0x1]
    %v120 = vld [vmem:[%s0 + $0x340] sm:$0x1]
    %v121 = vld [vmem:[%s0 + $0x348] sm:$0xff]
    %v122 = vld [vmem:[%s0 + $0x350] sm:$0xff]
    %v123 = vld [vmem:[%s0 + $0x358] sm:$0xff]
    %v124 = vld [vmem:[%s0 + $0x360] sm:$0xff]
    %v125 = vld [vmem:[%s0 + $0x368] sm:$0xff]
    %v126 = vld [vmem:[%s0 + $0x370] sm:$0xff]
    %v127 = vld [vmem:[%s0 + $0x378] sm:$0xff]
    %v128 = vld [vmem:[%s0 + $0x380] sm:$0xff]
    %v129 = vld [vmem:[%s0 + $0x388] sm:$0xff]
    %v130 = vld [vmem:[%s0 + $0x390] sm:$0xff]
    %v131 = vld [vmem:[%s0 + $0x398] sm:$0xff]
    %v132 = vld [vmem:[%s0 + $0x3a0] sm:$0xff]
    %v133 = vld [vmem:[%s0 + $0x3a8] sm:$0xff]
    %v134 = vld [vmem:[%s0 + $0x3b0] sm:$0xff]
    %v135 = vld [vmem:[%s0 + $0x3b8] sm:$0xff]
    %v136 = vld [vmem:[%s0 + $0x3c0] sm:$0xff]
    %v137 = vld [vmem:[%s0 + $0x3c8] sm:$0xff]
    %v138 = vld [vmem:[%s0 + $0x3d0] sm:$0xff]
    %v139 = vld [vmem:[%s0 + $0x3d8] sm:$0xff]
    %v140 = vld [vmem:[%s0 + $0x3e0] sm:$0xff]
    %v141 = vld [vmem:[%s0 + $0x3e8] sm:$0xff]
    %v142 = vld [vmem:[%s0 + $0x3f0] sm:$0xff]
    %v143 = vld [vmem:[%s0 + $0x3f8] sm:$0xff]
    %v144 = vld [vmem:[%s0 + $0x400] sm:$0xff]
    %v145 = vld [vmem:[%s0 + $0x408] sm:$0xff]
    %v146 = vld [vmem:[%s0 + $0x410] sm:$0xff]
    %v147 = vld [vmem:[%s0 + $0x418] sm:$0xff]
    %v148 = vld [vmem:[%s0 + $0x420] sm:$0xff]
    %v149 = vld [vmem:[%s0 + $0x428] sm:$0xff]
    %v150 = vld [vmem:[%s0 + $0x430] sm:$0xff]
    %v151 = vld [vmem:[%s0 + $0x438] sm:$0xff]
    %v152 = vld [vmem:[%s0 + $0x440] sm:$0xff]
    %v153 = vld [vmem:[%s0 + $0x448] sm:$0xff]
    %v154 = vld [vmem:[%s0 + $0x450] sm:$0xff]
    %v155 = vld [vmem:[%s0 + $0x458] sm:$0xff]
    %v156 = vld [vmem:[%s0 + $0x460] sm:$0xff]
    %v157 = vld [vmem:[%s0 + $0x468] sm:$0xff]
    %v158 = vld [vmem:[%s0 + $0x470] sm:$0xff]
    %v159 = vld [vmem:[%s0 + $0x478] sm:$0xff]
    %v160 = vld [vmem:[%s0 + $0x480] sm:$0xff]
    %v161 = vld [vmem:[%s0 + $0x488] sm:$0xff]
    %v162 = vld [vmem:[%s0 + $0x490] sm:$0xff]
    %v163 = vld [vmem:[%s0 + $0x498] sm:$0xff]
    %v164 = vld [vmem:[%s0 + $0x4a0] sm:$0xff]
    %v165 = vld [vmem:[%s0 + $0x4a8] sm:$0xff]
    %v166 = vld [vmem:[%s0 + $0x4b0] sm:$0xff]
    %v167 = vld [vmem:[%s0 + $0x4b8] sm:$0xff]
    %v168 = vld [vmem:[%s0 + $0x4c0] sm:$0xff]
    %v169 = vld [vmem:[%s0 + $0x4c8] sm:$0xff]
    %v170 = vld [vmem:[%s0 + $0x4d0] sm:$0xff]
    %v171 = vld [vmem:[%s0 + $0x4d8] sm:$0xff]
    %v172 = vld [vmem:[%s0 + $0x4e0] sm:$0xff]
    %v173 = vld [vmem:[%s0 + $0x4e8] sm:$0xff]
    %v174 = vld [vmem:[%s0 + $0x4f0] sm:$0xff]
    %v175 = vld [vmem:[%s0 + $0x4f8] sm:$0xff]
    %v176 = vld [vmem:[%s0 + $0x500] sm:$0xff]
    %v177 = vld [vmem:[%s0 + $0x508] sm:$0xff]
    %v178 = vld [vmem:[%s0 + $0x510] sm:$0xff]
    %v179 = vld [vmem:[%s0 + $0x518] sm:$0xff]
    %v180 = vld [vmem:[%s0 + $0x520] sm:$0xff]
    %v181 = vld [vmem:[%s0 + $0x528] sm:$0xff]
    %v182 = vld [vmem:[%s0 + $0x530] sm:$0xff]
    %v183 = vld [vmem:[%s0 + $0x538] sm:$0xff]
    %v184 = vld [vmem:[%s0 + $0x540] sm:$0xff]
    %v185 = vld [vmem:[%s0 + $0x548] sm:$0xff]
    %v186 = vld [vmem:[%s0 + $0x550] sm:$0xff]
    %v187 = vld [vmem:[%s0 + $0x558] sm:$0xff]
    %v188 = vld [vmem:[%s0 + $0x560] sm:$0xff]
    %v189 = vld [vmem:[%s0 + $0x568] sm:$0xff]
    %v190 = vld [vmem:[%s0 + $0x570] sm:$0xff]
    %v191 = vld [vmem:[%s0 + $0x578] sm:$0xff]
    %v192 = vld [vmem:[%s0 + $0x580] sm:$0xff]
    %v193 = vld [vmem:[%s0 + $0x588] sm:$0xff]
    %v194 = vld [vmem:[%s0 + $0x590] sm:$0xff]
    %v195 = vld [vmem:[%s0 + $0x598] sm:$0xff]
    %v196 = vld [vmem:[%s0 + $0x5a0] sm:$0xff]
    %v197 = vld [vmem:[%s0 + $0x5a8] sm:$0xff]
    %v198 = vld [vmem:[%s0 + $0x5b0] sm:$0xff]
    %v199 = vld [vmem:[%s0 + $0x5b8] sm:$0xff]
    %v200 = vld [vmem:[%s0 + $0x5c0] sm:$0xff]
    %v201 = vld [vmem:[%s0 + $0x5c8] sm:$0xff]
    %v202 = vld [vmem:[%s0 + $0x5d0] sm:$0xff]
    %v203 = vld [vmem:[%s0 + $0x5d8] sm:$0xff]
    %v204 = vld [vmem:[%s0 + $0x5e0] sm:$0xff]
    %v205 = vld [vmem:[%s0 + $0x5e8] sm:$0xff]
    %v206 = vld [vmem:[%s0 + $0x5f0] sm:$0xff]
    %v207 = vld [vmem:[%s0 + $0x5f8] sm:$0xff]
    %v208 = vld [vmem:[%s0 + $0x600] sm:$0xff]
    %v209 = vld [vmem:[%s0 + $0x608] sm:$0xff]
    %v210 = vld [vmem:[%s0 + $0x610] sm:$0xff]
    %v211 = vld [vmem:[%s0 + $0x618] sm:$0x1]
    %v212 = vld [vmem:[%s0 + $0x620] sm:$0x1]
    %v213 = vld [vmem:[%s0 + $0x628] sm:$0x1]
    %v214 = vld [vmem:[%s0 + $0x630] sm:$0x1]
    %v215 = vld [vmem:[%s0 + $0x638] sm:$0x1]
    %v216 = vld [vmem:[%s0 + $0x640] sm:$0x1]
    %v217 = vld [vmem:[%s0 + $0x648] sm:$0x1]
    %v218 = vld [vmem:[%s0 + $0x650] sm:$0x1]
    %v219 = vld [vmem:[%s0 + $0x658] sm:$0x1]
    %v220 = vld [vmem:[%s0 + $0x660] sm:$0x1]
    %v221 = vld [vmem:[%s0 + $0x668] sm:$0x1]
    %v222 = vld [vmem:[%s0 + $0x670] sm:$0x1]
    %v223 = vld [vmem:[%s0 + $0x678] sm:$0x1]
    %v224 = vld [vmem:[%s0 + $0x680] sm:$0x1]
    %v225 = vld [vmem:[%s0 + $0x688] sm:$0x1]
    %v226 = vmax.f32 %v16, 0.0
    %v227 = vmax.f32 %v17, 0.0
    %v228 = vmax.f32 %v18, 0.0
    %v229 = vmax.f32 %v19, 0.0
    %v230 = vmax.f32 %v20, 0.0
    %v231 = vmax.f32 %v21, 0.0
    %v232 = vmax.f32 %v22, 0.0
    %v233 = vmax.f32 %v23, 0.0
    %v234 = vmax.f32 %v24, 0.0
    %v235 = vmax.f32 %v25, 0.0
    %v236 = vmax.f32 %v26, 0.0
    %v237 = vmax.f32 %v27, 0.0
    %v238 = vmax.f32 %v28, 0.0
    %v239 = vmax.f32 %v29, 0.0
    %v240 = vmax.f32 %v30, 0.0
    %v241 = vmax.f32 %v31, 0.0
    %v242 = vmax.f32 %v32, 0.0
    %v243 = vmax.f32 %v33, 0.0
    %v244 = vmax.f32 %v34, 0.0
    %v245 = vmax.f32 %v35, 0.0
    %v246 = vmax.f32 %v36, 0.0
    %v247 = vmax.f32 %v37, 0.0
    %v248 = vmax.f32 %v38, 0.0
    %v249 = vmax.f32 %v39, 0.0
    %v250 = vmax.f32 %v40, 0.0
    %v251 = vmax.f32 %v41, 0.0
    %v252 = vmax.f32 %v42, 0.0
    %v253 = vmax.f32 %v43, 0.0
    %v254 = vmax.f32 %v44, 0.0
    %v255 = vmax.f32 %v45, 0.0
    %v256 = vmax.f32 %v46, 0.0
    %v257 = vmax.f32 %v47, 0.0
    %v258 = vmax.f32 %v48, 0.0
    %v259 = vmax.f32 %v49, 0.0
    %v260 = vmax.f32 %v50, 0.0
    %v261 = vmax.f32 %v51, 0.0
    %v262 = vmax.f32 %v52, 0.0
    %v263 = vmax.f32 %v53, 0.0
    %v264 = vmax.f32 %v54, 0.0
    %v265 = vmax.f32 %v55, 0.0
    %v266 = vmax.f32 %v56, 0.0
    %v267 = vmax.f32 %v57, 0.0
    %v268 = vmax.f32 %v58, 0.0
    %v269 = vmax.f32 %v59, 0.0
    %v270 = vmax.f32 %v60, 0.0
    %v271 = vmax.f32 %v61, 0.0
    %v272 = vmax.f32 %v62, 0.0
    %v273 = vmax.f32 %v63, 0.0
    %v274 = vmax.f32 %v64, 0.0
    %v275 = vmax.f32 %v65, 0.0
    %v276 = vmax.f32 %v66, 0.0
    %v277 = vmax.f32 %v67, 0.0
    %v278 = vmax.f32 %v68, 0.0
    %v279 = vmax.f32 %v69, 0.0
    %v280 = vmax.f32 %v70, 0.0
    %v281 = vmax.f32 %v71, 0.0
    %v282 = vmax.f32 %v72, 0.0
    %v283 = vmax.f32 %v73, 0.0
    %v284 = vmax.f32 %v74, 0.0
    %v285 = vmax.f32 %v75, 0.0
    %v286 = vmax.f32 %v76, 0.0
    %v287 = vmax.f32 %v77, 0.0
    %v288 = vmax.f32 %v78, 0.0
    %v289 = vmax.f32 %v79, 0.0
    %v290 = vmax.f32 %v80, 0.0
    %v291 = vmax.f32 %v81, 0.0
    %v292 = vmax.f32 %v82, 0.0
    %v293 = vmax.f32 %v83, 0.0
    %v294 = vmax.f32 %v84, 0.0
    %v295 = vmax.f32 %v85, 0.0
    %v296 = vmax.f32 %v86, 0.0
    %v297 = vmax.f32 %v87, 0.0
    %v298 = vmax.f32 %v88, 0.0
    %v299 = vmax.f32 %v89, 0.0
    %v300 = vmax.f32 %v90, 0.0
    %v301 = vmax.f32 %v91, 0.0
    %v302 = vmax.f32 %v92, 0.0
    %v303 = vmax.f32 %v93, 0.0
    %v304 = vmax.f32 %v94, 0.0
    %v305 = vmax.f32 %v95, 0.0
    %v306 = vmax.f32 %v96, 0.0
    %v307 = vmax.f32 %v97, 0.0
    %v308 = vmax.f32 %v98, 0.0
    %v309 = vmax.f32 %v99, 0.0
    %v310 = vmax.f32 %v100, 0.0
    %v311 = vmax.f32 %v101, 0.0
    %v312 = vmax.f32 %v102, 0.0
    %v313 = vmax.f32 %v103, 0.0
    %v314 = vmax.f32 %v104, 0.0
    %v315 = vmax.f32 %v105, 0.0
    %v316 = vmax.f32 %v106, 0.0
    %v317 = vmax.f32 %v107, 0.0
    %v318 = vmax.f32 %v108, 0.0
    %v319 = vmax.f32 %v109, 0.0
    %v320 = vmax.f32 %v110, 0.0
    %v321 = vmax.f32 %v111, 0.0
    %v322 = vmax.f32 %v112, 0.0
    %v323 = vmax.f32 %v113, 0.0
    %v324 = vmax.f32 %v114, 0.0
    %v325 = vmax.f32 %v115, 0.0
    %v326 = vmax.f32 %v116, 0.0
    %v327 = vmax.f32 %v117, 0.0
    %v328 = vmax.f32 %v118, 0.0
    %v329 = vmax.f32 %v119, 0.0
    %v330 = vmax.f32 %v120, 0.0
    %v331 = vmax.f32 %v121, 0.0
    %v332 = vmax.f32 %v122, 0.0
    %v333 = vmax.f32 %v123, 0.0
    %v334 = vmax.f32 %v124, 0.0
    %v335 = vmax.f32 %v125, 0.0
    %v336 = vmax.f32 %v126, 0.0
    %v337 = vmax.f32 %v127, 0.0
    %v338 = vmax.f32 %v128, 0.0
    %v339 = vmax.f32 %v129, 0.0
    %v340 = vmax.f32 %v130, 0.0
    %v341 = vmax.f32 %v131, 0.0
    %v342 = vmax.f32 %v132, 0.0
    %v343 = vmax.f32 %v133, 0.0
    %v344 = vmax.f32 %v134, 0.0
    %v345 = vmax.f32 %v135, 0.0
    %v346 = vmax.f32 %v136, 0.0
    %v347 = vmax.f32 %v137, 0.0
    %v348 = vmax.f32 %v138, 0.0
    %v349 = vmax.f32 %v139, 0.0
    %v350 = vmax.f32 %v140, 0.0
    %v351 = vmax.f32 %v141, 0.0
    %v352 = vmax.f32 %v142, 0.0
    %v353 = vmax.f32 %v143, 0.0
    %v354 = vmax.f32 %v144, 0.0
    %v355 = vmax.f32 %v145, 0.0
    %v356 = vmax.f32 %v146, 0.0
    %v357 = vmax.f32 %v147, 0.0
    %v358 = vmax.f32 %v148, 0.0
    %v359 = vmax.f32 %v149, 0.0
    %v360 = vmax.f32 %v150, 0.0
    %v361 = vmax.f32 %v151, 0.0
    %v362 = vmax.f32 %v152, 0.0
    %v363 = vmax.f32 %v153, 0.0
    %v364 = vmax.f32 %v154, 0.0
    %v365 = vmax.f32 %v155, 0.0
    %v366 = vmax.f32 %v156, 0.0
    %v367 = vmax.f32 %v157, 0.0
    %v368 = vmax.f32 %v158, 0.0
    %v369 = vmax.f32 %v159, 0.0
    %v370 = vmax.f32 %v160, 0.0
    %v371 = vmax.f32 %v161, 0.0
    %v372 = vmax.f32 %v162, 0.0
    %v373 = vmax.f32 %v163, 0.0
    %v374 = vmax.f32 %v164, 0.0
    %v375 = vmax.f32 %v165, 0.0
    %v376 = vmax.f32 %v166, 0.0
    %v377 = vmax.f32 %v167, 0.0
    %v378 = vmax.f32 %v168, 0.0
    %v379 = vmax.f32 %v169, 0.0
    %v380 = vmax.f32 %v170, 0.0
    %v381 = vmax.f32 %v171, 0.0
    %v382 = vmax.f32 %v172, 0.0
    %v383 = vmax.f32 %v173, 0.0
    %v384 = vmax.f32 %v174, 0.0
    %v385 = vmax.f32 %v175, 0.0
    %v386 = vmax.f32 %v176, 0.0
    %v387 = vmax.f32 %v177, 0.0
    %v388 = vmax.f32 %v178, 0.0
    %v389 = vmax.f32 %v179, 0.0
    %v390 = vmax.f32 %v180, 0.0
    %v391 = vmax.f32 %v181, 0.0
    %v392 = vmax.f32 %v182, 0.0
    %v393 = vmax.f32 %v183, 0.0
    %v394 = vmax.f32 %v184, 0.0
    %v395 = vmax.f32 %v185, 0.0
    %v396 = vmax.f32 %v186, 0.0
    %v397 = vmax.f32 %v187, 0.0
    %v398 = vmax.f32 %v188, 0.0
    %v399 = vmax.f32 %v189, 0.0
    %v400 = vmax.f32 %v190, 0.0
    %v401 = vmax.f32 %v191, 0.0
    %v402 = vmax.f32 %v192, 0.0
    %v403 = vmax.f32 %v193, 0.0
    %v404 = vmax.f32 %v194, 0.0
    %v405 = vmax.f32 %v195, 0.0
    %v406 = vmax.f32 %v196, 0.0
    %v407 = vmax.f32 %v197, 0.0
    %v408 = vmax.f32 %v198, 0.0
    %v409 = vmax.f32 %v199, 0.0
    %v410 = vmax.f32 %v200, 0.0
    %v411 = vmax.f32 %v201, 0.0
    %v412 = vmax.f32 %v202, 0.0
    %v413 = vmax.f32 %v203, 0.0
    %v414 = vmax.f32 %v204, 0.0
    %v415 = vmax.f32 %v205, 0.0
    %v416 = vmax.f32 %v206, 0.0
    %v417 = vmax.f32 %v207, 0.0
    %v418 = vmax.f32 %v208, 0.0
    %v419 = vmax.f32 %v209, 0.0
    %v420 = vmax.f32 %v210, 0.0
    %v421 = vmax.f32 %v211, 0.0
    %v422 = vmax.f32 %v212, 0.0
    %v423 = vmax.f32 %v213, 0.0
    %v424 = vmax.f32 %v214, 0.0
    %v425 = vmax.f32 %v215, 0.0
    %v426 = vmax.f32 %v216, 0.0
    %v427 = vmax.f32 %v217, 0.0
    %v428 = vmax.f32 %v218, 0.0
    %v429 = vmax.f32 %v219, 0.0
    %v430 = vmax.f32 %v220, 0.0
    %v431 = vmax.f32 %v221, 0.0
    %v432 = vmax.f32 %v222, 0.0
    %v433 = vmax.f32 %v223, 0.0
    %v434 = vmax.f32 %v224, 0.0
    %v435 = vmax.f32 %v225, 0.0
    %v436 = vadd.f32 %v226, %v241
    %v437 = vadd.f32 %v436, %v256
    %v438 = vadd.f32 %v437, %v271
    %v439 = vadd.f32 %v438, %v286
    %v440 = vadd.f32 %v439, %v301
    %vm441 = vcmask 1040384
    %v442 = vsel %vm441, %v316, 0.0
    %v443 = vadd.f32 %v440, %v442
    %v444 = vrot.slane %v443, 4
    %v445 = vadd.f32 %v443, %v444
    %v446 = vrot.slane %v445, 2
    %v447 = vadd.f32 %v445, %v446
    %v448 = vrot.slane %v447, 1
    %v449 = vadd.f32 %v447, %v448
    %v450 = vadd.f32 %v227, %v242
    %v451 = vadd.f32 %v450, %v257
    %v452 = vadd.f32 %v451, %v272
    %v453 = vadd.f32 %v452, %v287
    %v454 = vadd.f32 %v453, %v302
    %v455 = vsel %vm441, %v317, 0.0
    %v456 = vadd.f32 %v454, %v455
    %v457 = vrot.slane %v456, 4
    %v458 = vadd.f32 %v456, %v457
    %v459 = vrot.slane %v458, 2
    %v460 = vadd.f32 %v458, %v459
    %v461 = vrot.slane %v460, 1
    %v462 = vadd.f32 %v460, %v461
    %v463 = vadd.f32 %v228, %v243
    %v464 = vadd.f32 %v463, %v258
    %v465 = vadd.f32 %v464, %v273
    %v466 = vadd.f32 %v465, %v288
    %v467 = vadd.f32 %v466, %v303
    %v468 = vsel %vm441, %v318, 0.0
    %v469 = vadd.f32 %v467, %v468
    %v470 = vrot.slane %v469, 4
    %v471 = vadd.f32 %v469, %v470
    %v472 = vrot.slane %v471, 2
    %v473 = vadd.f32 %v471, %v472
    %v474 = vrot.slane %v473, 1
    %v475 = vadd.f32 %v473, %v474
    %v476 = vadd.f32 %v229, %v244
    %v477 = vadd.f32 %v476, %v259
    %v478 = vadd.f32 %v477, %v274
    %v479 = vadd.f32 %v478, %v289
    %v480 = vadd.f32 %v479, %v304
    %v481 = vsel %vm441, %v319, 0.0
    %v482 = vadd.f32 %v480, %v481
    %v483 = vrot.slane %v482, 4
    %v484 = vadd.f32 %v482, %v483
    %v485 = vrot.slane %v484, 2
    %v486 = vadd.f32 %v484, %v485
    %v487 = vrot.slane %v486, 1
    %v488 = vadd.f32 %v486, %v487
    %v489 = vadd.f32 %v230, %v245
    %v490 = vadd.f32 %v489, %v260
    %v491 = vadd.f32 %v490, %v275
    %v492 = vadd.f32 %v491, %v290
    %v493 = vadd.f32 %v492, %v305
    %v494 = vsel %vm441, %v320, 0.0
    %v495 = vadd.f32 %v493, %v494
    %v496 = vrot.slane %v495, 4
    %v497 = vadd.f32 %v495, %v496
    %v498 = vrot.slane %v497, 2
    %v499 = vadd.f32 %v497, %v498
    %v500 = vrot.slane %v499, 1
    %v501 = vadd.f32 %v499, %v500
    %v502 = vadd.f32 %v231, %v246
    %v503 = vadd.f32 %v502, %v261
    %v504 = vadd.f32 %v503, %v276
    %v505 = vadd.f32 %v504, %v291
    %v506 = vadd.f32 %v505, %v306
    %v507 = vsel %vm441, %v321, 0.0
    %v508 = vadd.f32 %v506, %v507
    %v509 = vrot.slane %v508, 4
    %v510 = vadd.f32 %v508, %v509
    %v511 = vrot.slane %v510, 2
    %v512 = vadd.f32 %v510, %v511
    %v513 = vrot.slane %v512, 1
    %v514 = vadd.f32 %v512, %v513
    %v515 = vadd.f32 %v232, %v247
    %v516 = vadd.f32 %v515, %v262
    %v517 = vadd.f32 %v516, %v277
    %v518 = vadd.f32 %v517, %v292
    %v519 = vadd.f32 %v518, %v307
    %v520 = vsel %vm441, %v322, 0.0
    %v521 = vadd.f32 %v519, %v520
    %v522 = vrot.slane %v521, 4
    %v523 = vadd.f32 %v521, %v522
    %v524 = vrot.slane %v523, 2
    %v525 = vadd.f32 %v523, %v524
    %v526 = vrot.slane %v525, 1
    %v527 = vadd.f32 %v525, %v526
    %v528 = vadd.f32 %v233, %v248
    %v529 = vadd.f32 %v528, %v263
    %v530 = vadd.f32 %v529, %v278
    %v531 = vadd.f32 %v530, %v293
    %v532 = vadd.f32 %v531, %v308
    %v533 = vsel %vm441, %v323, 0.0
    %v534 = vadd.f32 %v532, %v533
    %v535 = vrot.slane %v534, 4
    %v536 = vadd.f32 %v534, %v535
    %v537 = vrot.slane %v536, 2
    %v538 = vadd.f32 %v536, %v537
    %v539 = vrot.slane %v538, 1
    %v540 = vadd.f32 %v538, %v539
    %v541 = vadd.f32 %v234, %v249
    %v542 = vadd.f32 %v541, %v264
    %v543 = vadd.f32 %v542, %v279
    %v544 = vadd.f32 %v543, %v294
    %v545 = vadd.f32 %v544, %v309
    %v546 = vsel %vm441, %v324, 0.0
    %v547 = vadd.f32 %v545, %v546
    %v548 = vrot.slane %v547, 4
    %v549 = vadd.f32 %v547, %v548
    %v550 = vrot.slane %v549, 2
    %v551 = vadd.f32 %v549, %v550
    %v552 = vrot.slane %v551, 1
    %v553 = vadd.f32 %v551, %v552
    %v554 = vadd.f32 %v235, %v250
    %v555 = vadd.f32 %v554, %v265
    %v556 = vadd.f32 %v555, %v280
    %v557 = vadd.f32 %v556, %v295
    %v558 = vadd.f32 %v557, %v310
    %v559 = vsel %vm441, %v325, 0.0
    %v560 = vadd.f32 %v558, %v559
    %v561 = vrot.slane %v560, 4
    %v562 = vadd.f32 %v560, %v561
    %v563 = vrot.slane %v562, 2
    %v564 = vadd.f32 %v562, %v563
    %v565 = vrot.slane %v564, 1
    %v566 = vadd.f32 %v564, %v565
    %v567 = vadd.f32 %v236, %v251
    %v568 = vadd.f32 %v567, %v266
    %v569 = vadd.f32 %v568, %v281
    %v570 = vadd.f32 %v569, %v296
    %v571 = vadd.f32 %v570, %v311
    %v572 = vsel %vm441, %v326, 0.0
    %v573 = vadd.f32 %v571, %v572
    %v574 = vrot.slane %v573, 4
    %v575 = vadd.f32 %v573, %v574
    %v576 = vrot.slane %v575, 2
    %v577 = vadd.f32 %v575, %v576
    %v578 = vrot.slane %v577, 1
    %v579 = vadd.f32 %v577, %v578
    %v580 = vadd.f32 %v237, %v252
    %v581 = vadd.f32 %v580, %v267
    %v582 = vadd.f32 %v581, %v282
    %v583 = vadd.f32 %v582, %v297
    %v584 = vadd.f32 %v583, %v312
    %v585 = vsel %vm441, %v327, 0.0
    %v586 = vadd.f32 %v584, %v585
    %v587 = vrot.slane %v586, 4
    %v588 = vadd.f32 %v586, %v587
    %v589 = vrot.slane %v588, 2
    %v590 = vadd.f32 %v588, %v589
    %v591 = vrot.slane %v590, 1
    %v592 = vadd.f32 %v590, %v591
    %v593 = vadd.f32 %v238, %v253
    %v594 = vadd.f32 %v593, %v268
    %v595 = vadd.f32 %v594, %v283
    %v596 = vadd.f32 %v595, %v298
    %v597 = vadd.f32 %v596, %v313
    %v598 = vsel %vm441, %v328, 0.0
    %v599 = vadd.f32 %v597, %v598
    %v600 = vrot.slane %v599, 4
    %v601 = vadd.f32 %v599, %v600
    %v602 = vrot.slane %v601, 2
    %v603 = vadd.f32 %v601, %v602
    %v604 = vrot.slane %v603, 1
    %v605 = vadd.f32 %v603, %v604
    %v606 = vadd.f32 %v239, %v254
    %v607 = vadd.f32 %v606, %v269
    %v608 = vadd.f32 %v607, %v284
    %v609 = vadd.f32 %v608, %v299
    %v610 = vadd.f32 %v609, %v314
    %v611 = vsel %vm441, %v329, 0.0
    %v612 = vadd.f32 %v610, %v611
    %v613 = vrot.slane %v612, 4
    %v614 = vadd.f32 %v612, %v613
    %v615 = vrot.slane %v614, 2
    %v616 = vadd.f32 %v614, %v615
    %v617 = vrot.slane %v616, 1
    %v618 = vadd.f32 %v616, %v617
    %v619 = vadd.f32 %v240, %v255
    %v620 = vadd.f32 %v619, %v270
    %v621 = vadd.f32 %v620, %v285
    %v622 = vadd.f32 %v621, %v300
    %v623 = vadd.f32 %v622, %v315
    %v624 = vsel %vm441, %v330, 0.0
    %v625 = vadd.f32 %v623, %v624
    %v626 = vrot.slane %v625, 4
    %v627 = vadd.f32 %v625, %v626
    %v628 = vrot.slane %v627, 2
    %v629 = vadd.f32 %v627, %v628
    %v630 = vrot.slane %v629, 1
    %v631 = vadd.f32 %v629, %v630
    %v632 = vadd.f32 %v331, %v346
    %v633 = vadd.f32 %v632, %v361
    %v634 = vadd.f32 %v633, %v376
    %v635 = vadd.f32 %v634, %v391
    %v636 = vadd.f32 %v635, %v406
    %v637 = vsel %vm441, %v421, 0.0
    %v638 = vadd.f32 %v636, %v637
    %v639 = vrot.slane %v638, 4
    %v640 = vadd.f32 %v638, %v639
    %v641 = vrot.slane %v640, 2
    %v642 = vadd.f32 %v640, %v641
    %v643 = vrot.slane %v642, 1
    %v644 = vadd.f32 %v642, %v643
    %v645 = vadd.f32 %v332, %v347
    %v646 = vadd.f32 %v645, %v362
    %v647 = vadd.f32 %v646, %v377
    %v648 = vadd.f32 %v647, %v392
    %v649 = vadd.f32 %v648, %v407
    %v650 = vsel %vm441, %v422, 0.0
    %v651 = vadd.f32 %v649, %v650
    %v652 = vrot.slane %v651, 4
    %v653 = vadd.f32 %v651, %v652
    %v654 = vrot.slane %v653, 2
    %v655 = vadd.f32 %v653, %v654
    %v656 = vrot.slane %v655, 1
    %v657 = vadd.f32 %v655, %v656
    %v658 = vadd.f32 %v333, %v348
    %v659 = vadd.f32 %v658, %v363
    %v660 = vadd.f32 %v659, %v378
    %v661 = vadd.f32 %v660, %v393
    %v662 = vadd.f32 %v661, %v408
    %v663 = vsel %vm441, %v423, 0.0
    %v664 = vadd.f32 %v662, %v663
    %v665 = vrot.slane %v664, 4
    %v666 = vadd.f32 %v664, %v665
    %v667 = vrot.slane %v666, 2
    %v668 = vadd.f32 %v666, %v667
    %v669 = vrot.slane %v668, 1
    %v670 = vadd.f32 %v668, %v669
    %v671 = vadd.f32 %v334, %v349
    %v672 = vadd.f32 %v671, %v364
    %v673 = vadd.f32 %v672, %v379
    %v674 = vadd.f32 %v673, %v394
    %v675 = vadd.f32 %v674, %v409
    %v676 = vsel %vm441, %v424, 0.0
    %v677 = vadd.f32 %v675, %v676
    %v678 = vrot.slane %v677, 4
    %v679 = vadd.f32 %v677, %v678
    %v680 = vrot.slane %v679, 2
    %v681 = vadd.f32 %v679, %v680
    %v682 = vrot.slane %v681, 1
    %v683 = vadd.f32 %v681, %v682
    %v684 = vadd.f32 %v335, %v350
    %v685 = vadd.f32 %v684, %v365
    %v686 = vadd.f32 %v685, %v380
    %v687 = vadd.f32 %v686, %v395
    %v688 = vadd.f32 %v687, %v410
    %v689 = vsel %vm441, %v425, 0.0
    %v690 = vadd.f32 %v688, %v689
    %v691 = vrot.slane %v690, 4
    %v692 = vadd.f32 %v690, %v691
    %v693 = vrot.slane %v692, 2
    %v694 = vadd.f32 %v692, %v693
    %v695 = vrot.slane %v694, 1
    %v696 = vadd.f32 %v694, %v695
    %v697 = vadd.f32 %v336, %v351
    %v698 = vadd.f32 %v697, %v366
    %v699 = vadd.f32 %v698, %v381
    %v700 = vadd.f32 %v699, %v396
    %v701 = vadd.f32 %v700, %v411
    %v702 = vsel %vm441, %v426, 0.0
    %v703 = vadd.f32 %v701, %v702
    %v704 = vrot.slane %v703, 4
    %v705 = vadd.f32 %v703, %v704
    %v706 = vrot.slane %v705, 2
    %v707 = vadd.f32 %v705, %v706
    %v708 = vrot.slane %v707, 1
    %v709 = vadd.f32 %v707, %v708
    %v710 = vadd.f32 %v337, %v352
    %v711 = vadd.f32 %v710, %v367
    %v712 = vadd.f32 %v711, %v382
    %v713 = vadd.f32 %v712, %v397
    %v714 = vadd.f32 %v713, %v412
    %v715 = vsel %vm441, %v427, 0.0
    %v716 = vadd.f32 %v714, %v715
    %v717 = vrot.slane %v716, 4
    %v718 = vadd.f32 %v716, %v717
    %v719 = vrot.slane %v718, 2
    %v720 = vadd.f32 %v718, %v719
    %v721 = vrot.slane %v720, 1
    %v722 = vadd.f32 %v720, %v721
    %v723 = vadd.f32 %v338, %v353
    %v724 = vadd.f32 %v723, %v368
    %v725 = vadd.f32 %v724, %v383
    %v726 = vadd.f32 %v725, %v398
    %v727 = vadd.f32 %v726, %v413
    %v728 = vsel %vm441, %v428, 0.0
    %v729 = vadd.f32 %v727, %v728
    %v730 = vrot.slane %v729, 4
    %v731 = vadd.f32 %v729, %v730
    %v732 = vrot.slane %v731, 2
    %v733 = vadd.f32 %v731, %v732
    %v734 = vrot.slane %v733, 1
    %v735 = vadd.f32 %v733, %v734
    %v736 = vadd.f32 %v339, %v354
    %v737 = vadd.f32 %v736, %v369
    %v738 = vadd.f32 %v737, %v384
    %v739 = vadd.f32 %v738, %v399
    %v740 = vadd.f32 %v739, %v414
    %v741 = vsel %vm441, %v429, 0.0
    %v742 = vadd.f32 %v740, %v741
    %v743 = vrot.slane %v742, 4
    %v744 = vadd.f32 %v742, %v743
    %v745 = vrot.slane %v744, 2
    %v746 = vadd.f32 %v744, %v745
    %v747 = vrot.slane %v746, 1
    %v748 = vadd.f32 %v746, %v747
    %v749 = vadd.f32 %v340, %v355
    %v750 = vadd.f32 %v749, %v370
    %v751 = vadd.f32 %v750, %v385
    %v752 = vadd.f32 %v751, %v400
    %v753 = vadd.f32 %v752, %v415
    %v754 = vsel %vm441, %v430, 0.0
    %v755 = vadd.f32 %v753, %v754
    %v756 = vrot.slane %v755, 4
    %v757 = vadd.f32 %v755, %v756
    %v758 = vrot.slane %v757, 2
    %v759 = vadd.f32 %v757, %v758
    %v760 = vrot.slane %v759, 1
    %v761 = vadd.f32 %v759, %v760
    %v762 = vadd.f32 %v341, %v356
    %v763 = vadd.f32 %v762, %v371
    %v764 = vadd.f32 %v763, %v386
    %v765 = vadd.f32 %v764, %v401
    %v766 = vadd.f32 %v765, %v416
    %v767 = vsel %vm441, %v431, 0.0
    %v768 = vadd.f32 %v766, %v767
    %v769 = vrot.slane %v768, 4
    %v770 = vadd.f32 %v768, %v769
    %v771 = vrot.slane %v770, 2
    %v772 = vadd.f32 %v770, %v771
    %v773 = vrot.slane %v772, 1
    %v774 = vadd.f32 %v772, %v773
    %v775 = vadd.f32 %v342, %v357
    %v776 = vadd.f32 %v775, %v372
    %v777 = vadd.f32 %v776, %v387
    %v778 = vadd.f32 %v777, %v402
    %v779 = vadd.f32 %v778, %v417
    %v780 = vsel %vm441, %v432, 0.0
    %v781 = vadd.f32 %v779, %v780
    %v782 = vrot.slane %v781, 4
    %v783 = vadd.f32 %v781, %v782
    %v784 = vrot.slane %v783, 2
    %v785 = vadd.f32 %v783, %v784
    %v786 = vrot.slane %v785, 1
    %v787 = vadd.f32 %v785, %v786
    %v788 = vadd.f32 %v343, %v358
    %v789 = vadd.f32 %v788, %v373
    %v790 = vadd.f32 %v789, %v388
    %v791 = vadd.f32 %v790, %v403
    %v792 = vadd.f32 %v791, %v418
    %v793 = vsel %vm441, %v433, 0.0
    %v794 = vadd.f32 %v792, %v793
    %v795 = vrot.slane %v794, 4
    %v796 = vadd.f32 %v794, %v795
    %v797 = vrot.slane %v796, 2
    %v798 = vadd.f32 %v796, %v797
    %v799 = vrot.slane %v798, 1
    %v800 = vadd.f32 %v798, %v799
    %v801 = vadd.f32 %v344, %v359
    %v802 = vadd.f32 %v801, %v374
    %v803 = vadd.f32 %v802, %v389
    %v804 = vadd.f32 %v803, %v404
    %v805 = vadd.f32 %v804, %v419
    %v806 = vsel %vm441, %v434, 0.0
    %v807 = vadd.f32 %v805, %v806
    %v808 = vrot.slane %v807, 4
    %v809 = vadd.f32 %v807, %v808
    %v810 = vrot.slane %v809, 2
    %v811 = vadd.f32 %v809, %v810
    %v812 = vrot.slane %v811, 1
    %v813 = vadd.f32 %v811, %v812
    %v814 = vadd.f32 %v345, %v360
    %v815 = vadd.f32 %v814, %v375
    %v816 = vadd.f32 %v815, %v390
    %v817 = vadd.f32 %v816, %v405
    %v818 = vadd.f32 %v817, %v420
    %v819 = vsel %vm441, %v435, 0.0
    %v820 = vadd.f32 %v818, %v819
    %v821 = vrot.slane %v820, 4
    %v822 = vadd.f32 %v820, %v821
    %v823 = vrot.slane %v822, 2
    %v824 = vadd.f32 %v822, %v823
    %v825 = vrot.slane %v824, 1
    %v826 = vadd.f32 %v824, %v825
    %v827 = vpack.c.bf16 %v449, %v449
    %v828 = vpack.c.bf16 %v462, %v462
    %v829 = vpack.c.bf16 %v475, %v475
    %v830 = vpack.c.bf16 %v488, %v488
    %v831 = vpack.c.bf16 %v501, %v501
    %v832 = vpack.c.bf16 %v514, %v514
    %v833 = vpack.c.bf16 %v527, %v527
    %v834 = vpack.c.bf16 %v540, %v540
    %v835 = vpack.c.bf16 %v553, %v553
    %v836 = vpack.c.bf16 %v566, %v566
    %v837 = vpack.c.bf16 %v579, %v579
    %v838 = vpack.c.bf16 %v592, %v592
    %v839 = vpack.c.bf16 %v605, %v605
    %v840 = vpack.c.bf16 %v618, %v618
    %v841 = vpack.c.bf16 %v631, %v631
    %v842 = vpack.c.bf16 %v644, %v644
    %v843 = vpack.c.bf16 %v657, %v657
    %v844 = vpack.c.bf16 %v670, %v670
    %v845 = vpack.c.bf16 %v683, %v683
    %v846 = vpack.c.bf16 %v696, %v696
    %v847 = vpack.c.bf16 %v709, %v709
    %v848 = vpack.c.bf16 %v722, %v722
    %v849 = vpack.c.bf16 %v735, %v735
    %v850 = vpack.c.bf16 %v748, %v748
    %v851 = vpack.c.bf16 %v761, %v761
    %v852 = vpack.c.bf16 %v774, %v774
    %v853 = vpack.c.bf16 %v787, %v787
    %v854 = vpack.c.bf16 %v800, %v800
    %v855 = vpack.c.bf16 %v813, %v813
    %v856 = vpack.c.bf16 %v826, %v826
    %v857 = vld [vmem:[%s1] sm:$0xf]
    %v858 = vld [vmem:[%s1 + $0x4] sm:$0xf]
    %v859 = vld [vmem:[%s1 + $0x8] sm:$0xf]
    %v860 = vld [vmem:[%s1 + $0xc] sm:$0xf]
    %v861 = vld [vmem:[%s1 + $0x10] sm:$0xf]
    %v862 = vld [vmem:[%s1 + $0x14] sm:$0xf]
    %v863 = vld [vmem:[%s1 + $0x18] sm:$0xf]
    %v864 = vld [vmem:[%s1 + $0x1c] sm:$0xf]
    %v865 = vld [vmem:[%s1 + $0x20] sm:$0xf]
    %v866 = vld [vmem:[%s1 + $0x24] sm:$0xf]
    %v867 = vld [vmem:[%s1 + $0x28] sm:$0xf]
    %v868 = vld [vmem:[%s1 + $0x2c] sm:$0xf]
    %v869 = vld [vmem:[%s1 + $0x30] sm:$0xf]
    %v870 = vld [vmem:[%s1 + $0x34] sm:$0xf]
    %v871 = vld [vmem:[%s1 + $0x38] sm:$0xf]
    %v872 = vld [vmem:[%s1 + $0x3c] sm:$0xf]
    %v873 = vld [vmem:[%s1 + $0x40] sm:$0xf]
    %v874 = vld [vmem:[%s1 + $0x44] sm:$0xf]
    %v875 = vld [vmem:[%s1 + $0x48] sm:$0xf]
    %v876 = vld [vmem:[%s1 + $0x4c] sm:$0xf]
    %v877 = vld [vmem:[%s1 + $0x50] sm:$0xf]
    %v878 = vld [vmem:[%s1 + $0x54] sm:$0xf]
    %v879 = vld [vmem:[%s1 + $0x58] sm:$0xf]
    %v880 = vld [vmem:[%s1 + $0x5c] sm:$0xf]
    %v881 = vld [vmem:[%s1 + $0x60] sm:$0xf]
    %v882 = vld [vmem:[%s1 + $0x64] sm:$0xf]
    %v883 = vld [vmem:[%s1 + $0x68] sm:$0xf]
    %v884 = vld [vmem:[%s1 + $0x6c] sm:$0xf]
    %v885 = vld [vmem:[%s1 + $0x70] sm:$0xf]
    %v886 = vld [vmem:[%s1 + $0x74] sm:$0xf]
    %v887 = vld [vmem:[%s1 + $0x78] sm:$0xf]
    %v888 = vld [vmem:[%s1 + $0x7c] sm:$0xf]
    %v889 = vld [vmem:[%s1 + $0x80] sm:$0xf]
    %v890 = vld [vmem:[%s1 + $0x84] sm:$0xf]
    %v891 = vld [vmem:[%s1 + $0x88] sm:$0xf]
    %v892 = vld [vmem:[%s1 + $0x8c] sm:$0xf]
    %v893 = vld [vmem:[%s1 + $0x90] sm:$0xf]
    %v894 = vld [vmem:[%s1 + $0x94] sm:$0xf]
    %v895 = vld [vmem:[%s1 + $0x98] sm:$0xf]
    %v896 = vld [vmem:[%s1 + $0x9c] sm:$0xf]
    %v897 = vld [vmem:[%s1 + $0xa0] sm:$0xf]
    %v898 = vld [vmem:[%s1 + $0xa4] sm:$0xf]
    %v899 = vld [vmem:[%s1 + $0xa8] sm:$0xf]
    %v900 = vld [vmem:[%s1 + $0xac] sm:$0xf]
    %v901 = vld [vmem:[%s1 + $0xb0] sm:$0xf]
    %v902 = vld [vmem:[%s1 + $0xb4] sm:$0xf]
    %v903 = vld [vmem:[%s1 + $0xb8] sm:$0xf]
    %v904 = vld [vmem:[%s1 + $0xbc] sm:$0xf]
    %v905 = vld [vmem:[%s1 + $0xc0] sm:$0xf]
    %v906 = vld [vmem:[%s1 + $0xc4] sm:$0xf]
    %v907 = vld [vmem:[%s1 + $0xc8] sm:$0xf]
    %v908 = vld [vmem:[%s1 + $0xcc] sm:$0xf]
    %v909 = vld [vmem:[%s1 + $0xd0] sm:$0xf]
    %v910 = vld [vmem:[%s1 + $0xd4] sm:$0xf]
    %v911 = vld [vmem:[%s1 + $0xd8] sm:$0xf]
    %v912 = vld [vmem:[%s1 + $0xdc] sm:$0xf]
    %v913 = vld [vmem:[%s1 + $0xe0] sm:$0xf]
    %v914 = vld [vmem:[%s1 + $0xe4] sm:$0xf]
    %v915 = vld [vmem:[%s1 + $0xe8] sm:$0xf]
    %v916 = vld [vmem:[%s1 + $0xec] sm:$0xf]
    %v917 = vld [vmem:[%s1 + $0xf0] sm:$0xf]
    %v918 = vld [vmem:[%s1 + $0xf4] sm:$0xf]
    %v919 = vld [vmem:[%s1 + $0xf8] sm:$0xf]
    %v920 = vld [vmem:[%s1 + $0xfc] sm:$0xf]
    %v921 = vld [vmem:[%s1 + $0x100] sm:$0xf]
    %v922 = vld [vmem:[%s1 + $0x104] sm:$0xf]
    %v923 = vld [vmem:[%s1 + $0x108] sm:$0xf]
    %v924 = vld [vmem:[%s1 + $0x10c] sm:$0xf]
    %v925 = vld [vmem:[%s1 + $0x110] sm:$0xf]
    %v926 = vld [vmem:[%s1 + $0x114] sm:$0xf]
    %v927 = vld [vmem:[%s1 + $0x118] sm:$0xf]
    %v928 = vld [vmem:[%s1 + $0x11c] sm:$0xf]
    %v929 = vld [vmem:[%s1 + $0x120] sm:$0xf]
    %v930 = vld [vmem:[%s1 + $0x124] sm:$0xf]
    %v931 = vld [vmem:[%s1 + $0x128] sm:$0xf]
    %v932 = vld [vmem:[%s1 + $0x12c] sm:$0xf]
    %v933 = vld [vmem:[%s1 + $0x130] sm:$0xf]
    %v934 = vld [vmem:[%s1 + $0x134] sm:$0xf]
    %v935 = vld [vmem:[%s1 + $0x138] sm:$0xf]
    %v936 = vld [vmem:[%s1 + $0x13c] sm:$0xf]
    %v937 = vld [vmem:[%s1 + $0x140] sm:$0xf]
    %v938 = vld [vmem:[%s1 + $0x144] sm:$0xf]
    %v939 = vld [vmem:[%s1 + $0x148] sm:$0xf]
    %v940 = vld [vmem:[%s1 + $0x14c] sm:$0xf]
    %v941 = vld [vmem:[%s1 + $0x150] sm:$0xf]
    %v942 = vld [vmem:[%s1 + $0x154] sm:$0xf]
    %v943 = vld [vmem:[%s1 + $0x158] sm:$0xf]
    %v944 = vld [vmem:[%s1 + $0x15c] sm:$0xf]
    %v945 = vld [vmem:[%s1 + $0x160] sm:$0xf]
    %v946 = vld [vmem:[%s1 + $0x164] sm:$0xf]
    %v947 = vld [vmem:[%s1 + $0x168] sm:$0xf]
    %v948 = vld [vmem:[%s1 + $0x16c] sm:$0xf]
    %v949 = vld [vmem:[%s1 + $0x170] sm:$0xf]
    %v950 = vld [vmem:[%s1 + $0x174] sm:$0xf]
    %v951 = vld [vmem:[%s1 + $0x178] sm:$0xf]
    %v952 = vld [vmem:[%s1 + $0x17c] sm:$0xf]
    %v953 = vld [vmem:[%s1 + $0x180] sm:$0xf]
    %v954 = vld [vmem:[%s1 + $0x184] sm:$0xf]
    %v955 = vld [vmem:[%s1 + $0x188] sm:$0xf]
    %v956 = vld [vmem:[%s1 + $0x18c] sm:$0xf]
    %v957 = vld [vmem:[%s1 + $0x190] sm:$0xf]
    %v958 = vld [vmem:[%s1 + $0x194] sm:$0xf]
    %v959 = vld [vmem:[%s1 + $0x198] sm:$0xf]
    %v960 = vld [vmem:[%s1 + $0x19c] sm:$0xf]
    %v961 = vld [vmem:[%s1 + $0x1a0] sm:$0xf]
    %v962 = vld [vmem:[%s1 + $0x1a4] sm:$0xf]
    %v963 = vld [vmem:[%s1 + $0x1a8] sm:$0xf]
    %v964 = vld [vmem:[%s1 + $0x1ac] sm:$0xf]
    %v965 = vld [vmem:[%s1 + $0x1b0] sm:$0xf]
    %v966 = vld [vmem:[%s1 + $0x1b4] sm:$0xf]
    %v967 = vld [vmem:[%s1 + $0x1b8] sm:$0xf]
    %v968 = vld [vmem:[%s1 + $0x1bc] sm:$0xf]
    %v969 = vld [vmem:[%s1 + $0x1c0] sm:$0xf]
    %v970 = vld [vmem:[%s1 + $0x1c4] sm:$0xf]
    %v971 = vld [vmem:[%s1 + $0x1c8] sm:$0xf]
    %v972 = vld [vmem:[%s1 + $0x1cc] sm:$0xf]
    %v973 = vld [vmem:[%s1 + $0x1d0] sm:$0xf]
    %v974 = vld [vmem:[%s1 + $0x1d4] sm:$0xf]
    %v975 = vld [vmem:[%s1 + $0x1d8] sm:$0xf]
    %v976 = vld [vmem:[%s1 + $0x1dc] sm:$0xf]
    %v977 = vld [vmem:[%s1 + $0x1e0] sm:$0xf]
    %v978 = vld [vmem:[%s1 + $0x1e4] sm:$0xf]
    %v979 = vld [vmem:[%s1 + $0x1e8] sm:$0xf]
    %v980 = vld [vmem:[%s1 + $0x1ec] sm:$0xf]
    %v981 = vld [vmem:[%s1 + $0x1f0] sm:$0xf]
    %v982 = vld [vmem:[%s1 + $0x1f4] sm:$0xf]
    %v983 = vld [vmem:[%s1 + $0x1f8] sm:$0xf]
    %v984 = vld [vmem:[%s1 + $0x1fc] sm:$0xf]
    %v985 = vld [vmem:[%s1 + $0x200] sm:$0xf]
    %v986 = vld [vmem:[%s1 + $0x204] sm:$0xf]
    %v987 = vld [vmem:[%s1 + $0x208] sm:$0xf]
    %v988 = vld [vmem:[%s1 + $0x20c] sm:$0xf]
    %v989 = vld [vmem:[%s1 + $0x210] sm:$0xf]
    %v990 = vld [vmem:[%s1 + $0x214] sm:$0xf]
    %v991 = vld [vmem:[%s1 + $0x218] sm:$0xf]
    %v992 = vld [vmem:[%s1 + $0x21c] sm:$0xf]
    %v993 = vld [vmem:[%s1 + $0x220] sm:$0xf]
    %v994 = vld [vmem:[%s1 + $0x224] sm:$0xf]
    %v995 = vld [vmem:[%s1 + $0x228] sm:$0xf]
    %v996 = vld [vmem:[%s1 + $0x22c] sm:$0xf]
    %v997 = vld [vmem:[%s1 + $0x230] sm:$0xf]
    %v998 = vld [vmem:[%s1 + $0x234] sm:$0xf]
    %v999 = vld [vmem:[%s1 + $0x238] sm:$0xf]
    %v1000 = vld [vmem:[%s1 + $0x23c] sm:$0xf]
    %v1001 = vld [vmem:[%s1 + $0x240] sm:$0xf]
    %v1002 = vld [vmem:[%s1 + $0x244] sm:$0xf]
    %v1003 = vld [vmem:[%s1 + $0x248] sm:$0xf]
    %v1004 = vld [vmem:[%s1 + $0x24c] sm:$0xf]
    %v1005 = vld [vmem:[%s1 + $0x250] sm:$0xf]
    %v1006 = vld [vmem:[%s1 + $0x254] sm:$0xf]
    %v1007 = vld [vmem:[%s1 + $0x258] sm:$0xf]
    %v1008 = vld [vmem:[%s1 + $0x25c] sm:$0xf]
    %v1009 = vld [vmem:[%s1 + $0x260] sm:$0xf]
    %v1010 = vld [vmem:[%s1 + $0x264] sm:$0xf]
    %v1011 = vld [vmem:[%s1 + $0x268] sm:$0xf]
    %v1012 = vld [vmem:[%s1 + $0x26c] sm:$0xf]
    %v1013 = vld [vmem:[%s1 + $0x270] sm:$0xf]
    %v1014 = vld [vmem:[%s1 + $0x274] sm:$0xf]
    %v1015 = vld [vmem:[%s1 + $0x278] sm:$0xf]
    %v1016 = vld [vmem:[%s1 + $0x27c] sm:$0xf]
    %v1017 = vld [vmem:[%s1 + $0x280] sm:$0xf]
    %v1018 = vld [vmem:[%s1 + $0x284] sm:$0xf]
    %v1019 = vld [vmem:[%s1 + $0x288] sm:$0xf]
    %v1020 = vld [vmem:[%s1 + $0x28c] sm:$0xf]
    %v1021 = vld [vmem:[%s1 + $0x290] sm:$0xf]
    %v1022 = vld [vmem:[%s1 + $0x294] sm:$0xf]
    %v1023 = vld [vmem:[%s1 + $0x298] sm:$0xf]
    %v1024 = vld [vmem:[%s1 + $0x29c] sm:$0xf]
    %v1025 = vld [vmem:[%s1 + $0x2a0] sm:$0xf]
    %v1026 = vld [vmem:[%s1 + $0x2a4] sm:$0xf]
    %v1027 = vld [vmem:[%s1 + $0x2a8] sm:$0xf]
    %v1028 = vld [vmem:[%s1 + $0x2ac] sm:$0xf]
    %v1029 = vld [vmem:[%s1 + $0x2b0] sm:$0xf]
    %v1030 = vld [vmem:[%s1 + $0x2b4] sm:$0xf]
    %v1031 = vld [vmem:[%s1 + $0x2b8] sm:$0xf]
    %v1032 = vld [vmem:[%s1 + $0x2bc] sm:$0xf]
    %v1033 = vld [vmem:[%s1 + $0x2c0] sm:$0xf]
    %v1034 = vld [vmem:[%s1 + $0x2c4] sm:$0xf]
    %v1035 = vld [vmem:[%s1 + $0x2c8] sm:$0xf]
    %v1036 = vld [vmem:[%s1 + $0x2cc] sm:$0xf]
    %v1037 = vld [vmem:[%s1 + $0x2d0] sm:$0xf]
    %v1038 = vld [vmem:[%s1 + $0x2d4] sm:$0xf]
    %v1039 = vld [vmem:[%s1 + $0x2d8] sm:$0xf]
    %v1040 = vld [vmem:[%s1 + $0x2dc] sm:$0xf]
    %v1041 = vld [vmem:[%s1 + $0x2e0] sm:$0xf]
    %v1042 = vld [vmem:[%s1 + $0x2e4] sm:$0xf]
    %v1043 = vld [vmem:[%s1 + $0x2e8] sm:$0xf]
    %v1044 = vld [vmem:[%s1 + $0x2ec] sm:$0xf]
    %v1045 = vld [vmem:[%s1 + $0x2f0] sm:$0xf]
    %v1046 = vld [vmem:[%s1 + $0x2f4] sm:$0xf]
    %v1047 = vld [vmem:[%s1 + $0x2f8] sm:$0xf]
    %v1048 = vld [vmem:[%s1 + $0x2fc] sm:$0xf]
    %v1049 = vld [vmem:[%s1 + $0x300] sm:$0xf]
    %v1050 = vld [vmem:[%s1 + $0x304] sm:$0xf]
    %v1051 = vld [vmem:[%s1 + $0x308] sm:$0xf]
    %v1052 = vld [vmem:[%s1 + $0x30c] sm:$0xf]
    %v1053 = vld [vmem:[%s1 + $0x310] sm:$0xf]
    %v1054 = vld [vmem:[%s1 + $0x314] sm:$0xf]
    %v1055 = vld [vmem:[%s1 + $0x318] sm:$0xf]
    %v1056 = vld [vmem:[%s1 + $0x31c] sm:$0xf]
    %v1057 = vld [vmem:[%s1 + $0x320] sm:$0xf]
    %v1058 = vld [vmem:[%s1 + $0x324] sm:$0xf]
    %v1059 = vld [vmem:[%s1 + $0x328] sm:$0xf]
    %v1060 = vld [vmem:[%s1 + $0x32c] sm:$0xf]
    %v1061 = vld [vmem:[%s1 + $0x330] sm:$0xf]
    %v1062 = vld [vmem:[%s1 + $0x334] sm:$0xf]
    %v1063 = vld [vmem:[%s1 + $0x338] sm:$0xf]
    %v1064 = vld [vmem:[%s1 + $0x33c] sm:$0xf]
    %v1065 = vld [vmem:[%s1 + $0x340] sm:$0xf]
    %v1066 = vld [vmem:[%s1 + $0x344] sm:$0xf]
    %v1067 = vld [vmem:[%s1 + $0x348] sm:$0xf]
    %v1068 = vld [vmem:[%s1 + $0x34c] sm:$0xf]
    %v1069 = vld [vmem:[%s1 + $0x350] sm:$0xf]
    %v1070 = vld [vmem:[%s1 + $0x354] sm:$0xf]
    %v1071 = vld [vmem:[%s1 + $0x358] sm:$0xf]
    %v1072 = vld [vmem:[%s1 + $0x35c] sm:$0xf]
    %v1073 = vld [vmem:[%s1 + $0x360] sm:$0xf]
    %v1074 = vld [vmem:[%s1 + $0x364] sm:$0xf]
    %v1075 = vld [vmem:[%s1 + $0x368] sm:$0xf]
    %v1076 = vld [vmem:[%s1 + $0x36c] sm:$0xf]
    %v1077 = vld [vmem:[%s1 + $0x370] sm:$0xf]
    %v1078 = vld [vmem:[%s1 + $0x374] sm:$0xf]
    %v1079 = vld [vmem:[%s1 + $0x378] sm:$0xf]
    %v1080 = vld [vmem:[%s1 + $0x37c] sm:$0xf]
    %v1081 = vld [vmem:[%s1 + $0x380] sm:$0xf]
    %v1082 = vld [vmem:[%s1 + $0x384] sm:$0xf]
    %v1083 = vld [vmem:[%s1 + $0x388] sm:$0xf]
    %v1084 = vld [vmem:[%s1 + $0x38c] sm:$0xf]
    %v1085 = vld [vmem:[%s1 + $0x390] sm:$0xf]
    %v1086 = vld [vmem:[%s1 + $0x394] sm:$0xf]
    %v1087 = vld [vmem:[%s1 + $0x398] sm:$0xf]
    %v1088 = vld [vmem:[%s1 + $0x39c] sm:$0xf]
    %v1089 = vld [vmem:[%s1 + $0x3a0] sm:$0xf]
    %v1090 = vld [vmem:[%s1 + $0x3a4] sm:$0xf]
    %v1091 = vld [vmem:[%s1 + $0x3a8] sm:$0xf]
    %v1092 = vld [vmem:[%s1 + $0x3ac] sm:$0xf]
    %v1093 = vld [vmem:[%s1 + $0x3b0] sm:$0xf]
    %v1094 = vld [vmem:[%s1 + $0x3b4] sm:$0xf]
    %v1095 = vld [vmem:[%s1 + $0x3b8] sm:$0xf]
    %v1096 = vld [vmem:[%s1 + $0x3bc] sm:$0xf]
    %v1097 = vld [vmem:[%s2] sm:$0x1]
    %v1099 = vlaneseq
    %v1100 = vshrl.u32 %v1099, 7
    %v1101 = vsub.s32 0, %v1100
    %v1102 = vrot.slane %v1097, %v1101
    %v1134 = vunpack.c.l.b16 %v827
    %v1135 = vunpack.c.l.b16 %v828
    %v1136 = vunpack.c.l.b16 %v829
    %v1137 = vunpack.c.l.b16 %v830
    %v1138 = vunpack.c.l.b16 %v831
    %v1139 = vunpack.c.l.b16 %v832
    %v1140 = vunpack.c.l.b16 %v833
    %v1141 = vunpack.c.l.b16 %v834
    %v1142 = vunpack.c.l.b16 %v835
    %v1143 = vunpack.c.l.b16 %v836
    %v1144 = vunpack.c.l.b16 %v837
    %v1145 = vunpack.c.l.b16 %v838
    %v1146 = vunpack.c.l.b16 %v839
    %v1147 = vunpack.c.l.b16 %v840
    %v1148 = vunpack.c.l.b16 %v841
    %v1149 = vunpack.c.l.b16 %v842
    %v1150 = vunpack.c.l.b16 %v843
    %v1151 = vunpack.c.l.b16 %v844
    %v1152 = vunpack.c.l.b16 %v845
    %v1153 = vunpack.c.l.b16 %v846
    %v1154 = vunpack.c.l.b16 %v847
    %v1155 = vunpack.c.l.b16 %v848
    %v1156 = vunpack.c.l.b16 %v849
    %v1157 = vunpack.c.l.b16 %v850
    %v1158 = vunpack.c.l.b16 %v851
    %v1159 = vunpack.c.l.b16 %v852
    %v1160 = vunpack.c.l.b16 %v853
    %v1161 = vunpack.c.l.b16 %v854
    %v1162 = vunpack.c.l.b16 %v855
    %v1163 = vunpack.c.l.b16 %v856
    %vm1164 = vcmask 1041409
    %v1165 = vsel %vm1164, %v1149, %v1134
    %v1166 = vsel %vm1164, %v1150, %v1135
    %v1167 = vsel %vm1164, %v1151, %v1136
    %v1168 = vsel %vm1164, %v1152, %v1137
    %v1169 = vsel %vm1164, %v1153, %v1138
    %v1170 = vsel %vm1164, %v1154, %v1139
    %v1171 = vsel %vm1164, %v1155, %v1140
    %v1172 = vsel %vm1164, %v1156, %v1141
    %v1173 = vsel %vm1164, %v1157, %v1142
    %v1174 = vsel %vm1164, %v1158, %v1143
    %v1175 = vsel %vm1164, %v1159, %v1144
    %v1176 = vsel %vm1164, %v1160, %v1145
    %v1177 = vsel %vm1164, %v1161, %v1146
    %v1178 = vsel %vm1164, %v1162, %v1147
    %v1179 = vsel %vm1164, %v1163, %v1148
    %v1180 = vpack.c.b16 %v1165, %v1165
    %v1181 = vpack.c.b16 %v1166, %v1166
    %v1182 = vpack.c.b16 %v1167, %v1167
    %v1183 = vpack.c.b16 %v1168, %v1168
    %v1184 = vpack.c.b16 %v1169, %v1169
    %v1185 = vpack.c.b16 %v1170, %v1170
    %v1186 = vpack.c.b16 %v1171, %v1171
    %v1187 = vpack.c.b16 %v1172, %v1172
    %v1188 = vpack.c.b16 %v1173, %v1173
    %v1189 = vpack.c.b16 %v1174, %v1174
    %v1190 = vpack.c.b16 %v1175, %v1175
    %v1191 = vpack.c.b16 %v1176, %v1176
    %v1192 = vpack.c.b16 %v1177, %v1177
    %v1193 = vpack.c.b16 %v1178, %v1178
    %v1194 = vpack.c.b16 %v1179, %v1179
    %v1450 = vunpack.c.l.b16 %v857
    %v1451 = vunpack.c.l.b16 %v858
    %v1452 = vunpack.c.l.b16 %v859
    %v1453 = vunpack.c.l.b16 %v860
    %v1454 = vunpack.c.l.b16 %v861
    %v1455 = vunpack.c.l.b16 %v862
    %v1456 = vunpack.c.l.b16 %v863
    %v1457 = vunpack.c.l.b16 %v864
    %v1458 = vunpack.c.l.b16 %v865
    %v1459 = vunpack.c.l.b16 %v866
    %v1460 = vunpack.c.l.b16 %v867
    %v1461 = vunpack.c.l.b16 %v868
    %v1462 = vunpack.c.l.b16 %v869
    %v1463 = vunpack.c.l.b16 %v870
    %v1464 = vunpack.c.l.b16 %v871
    %v1465 = vunpack.c.l.b16 %v872
    %v1466 = vunpack.c.l.b16 %v873
    %v1467 = vunpack.c.l.b16 %v874
    %v1468 = vunpack.c.l.b16 %v875
    %v1469 = vunpack.c.l.b16 %v876
    %v1470 = vunpack.c.l.b16 %v877
    %v1471 = vunpack.c.l.b16 %v878
    %v1472 = vunpack.c.l.b16 %v879
    %v1473 = vunpack.c.l.b16 %v880
    %v1474 = vunpack.c.l.b16 %v881
    %v1475 = vunpack.c.l.b16 %v882
    %v1476 = vunpack.c.l.b16 %v883
    %v1477 = vunpack.c.l.b16 %v884
    %v1478 = vunpack.c.l.b16 %v885
    %v1479 = vunpack.c.l.b16 %v886
    %v1480 = vunpack.c.l.b16 %v887
    %v1481 = vunpack.c.l.b16 %v888
    %v1482 = vunpack.c.l.b16 %v889
    %v1483 = vunpack.c.l.b16 %v890
    %v1484 = vunpack.c.l.b16 %v891
    %v1485 = vunpack.c.l.b16 %v892
    %v1486 = vunpack.c.l.b16 %v893
    %v1487 = vunpack.c.l.b16 %v894
    %v1488 = vunpack.c.l.b16 %v895
    %v1489 = vunpack.c.l.b16 %v896
    %v1490 = vunpack.c.l.b16 %v897
    %v1491 = vunpack.c.l.b16 %v898
    %v1492 = vunpack.c.l.b16 %v899
    %v1493 = vunpack.c.l.b16 %v900
    %v1494 = vunpack.c.l.b16 %v901
    %v1495 = vunpack.c.l.b16 %v902
    %v1496 = vunpack.c.l.b16 %v903
    %v1497 = vunpack.c.l.b16 %v904
    %v1498 = vunpack.c.l.b16 %v905
    %v1499 = vunpack.c.l.b16 %v906
    %v1500 = vunpack.c.l.b16 %v907
    %v1501 = vunpack.c.l.b16 %v908
    %v1502 = vunpack.c.l.b16 %v909
    %v1503 = vunpack.c.l.b16 %v910
    %v1504 = vunpack.c.l.b16 %v911
    %v1505 = vunpack.c.l.b16 %v912
    %v1506 = vunpack.c.l.b16 %v913
    %v1507 = vunpack.c.l.b16 %v914
    %v1508 = vunpack.c.l.b16 %v915
    %v1509 = vunpack.c.l.b16 %v916
    %v1510 = vunpack.c.l.b16 %v917
    %v1511 = vunpack.c.l.b16 %v918
    %v1512 = vunpack.c.l.b16 %v919
    %v1513 = vunpack.c.l.b16 %v920
    %v1514 = vunpack.c.l.b16 %v921
    %v1515 = vunpack.c.l.b16 %v922
    %v1516 = vunpack.c.l.b16 %v923
    %v1517 = vunpack.c.l.b16 %v924
    %v1518 = vunpack.c.l.b16 %v925
    %v1519 = vunpack.c.l.b16 %v926
    %v1520 = vunpack.c.l.b16 %v927
    %v1521 = vunpack.c.l.b16 %v928
    %v1522 = vunpack.c.l.b16 %v929
    %v1523 = vunpack.c.l.b16 %v930
    %v1524 = vunpack.c.l.b16 %v931
    %v1525 = vunpack.c.l.b16 %v932
    %v1526 = vunpack.c.l.b16 %v933
    %v1527 = vunpack.c.l.b16 %v934
    %v1528 = vunpack.c.l.b16 %v935
    %v1529 = vunpack.c.l.b16 %v936
    %v1530 = vunpack.c.l.b16 %v937
    %v1531 = vunpack.c.l.b16 %v938
    %v1532 = vunpack.c.l.b16 %v939
    %v1533 = vunpack.c.l.b16 %v940
    %v1534 = vunpack.c.l.b16 %v941
    %v1535 = vunpack.c.l.b16 %v942
    %v1536 = vunpack.c.l.b16 %v943
    %v1537 = vunpack.c.l.b16 %v944
    %v1538 = vunpack.c.l.b16 %v945
    %v1539 = vunpack.c.l.b16 %v946
    %v1540 = vunpack.c.l.b16 %v947
    %v1541 = vunpack.c.l.b16 %v948
    %v1542 = vunpack.c.l.b16 %v949
    %v1543 = vunpack.c.l.b16 %v950
    %v1544 = vunpack.c.l.b16 %v951
    %v1545 = vunpack.c.l.b16 %v952
    %v1546 = vunpack.c.l.b16 %v953
    %v1547 = vunpack.c.l.b16 %v954
    %v1548 = vunpack.c.l.b16 %v955
    %v1549 = vunpack.c.l.b16 %v956
    %v1550 = vunpack.c.l.b16 %v957
    %v1551 = vunpack.c.l.b16 %v958
    %v1552 = vunpack.c.l.b16 %v959
    %v1553 = vunpack.c.l.b16 %v960
    %v1554 = vunpack.c.l.b16 %v961
    %v1555 = vunpack.c.l.b16 %v962
    %v1556 = vunpack.c.l.b16 %v963
    %v1557 = vunpack.c.l.b16 %v964
    %v1558 = vunpack.c.l.b16 %v965
    %v1559 = vunpack.c.l.b16 %v966
    %v1560 = vunpack.c.l.b16 %v967
    %v1561 = vunpack.c.l.b16 %v968
    %v1562 = vunpack.c.l.b16 %v969
    %v1563 = vunpack.c.l.b16 %v970
    %v1564 = vunpack.c.l.b16 %v971
    %v1565 = vunpack.c.l.b16 %v972
    %v1566 = vunpack.c.l.b16 %v973
    %v1567 = vunpack.c.l.b16 %v974
    %v1568 = vunpack.c.l.b16 %v975
    %v1569 = vunpack.c.l.b16 %v976
    %v1570 = vunpack.c.l.b16 %v977
    %v1571 = vunpack.c.l.b16 %v978
    %v1572 = vunpack.c.l.b16 %v979
    %v1573 = vunpack.c.l.b16 %v980
    %v1574 = vunpack.c.l.b16 %v981
    %v1575 = vunpack.c.l.b16 %v982
    %v1576 = vunpack.c.l.b16 %v983
    %v1577 = vunpack.c.l.b16 %v984
    %v1578 = vunpack.c.l.b16 %v985
    %v1579 = vunpack.c.l.b16 %v986
    %v1580 = vunpack.c.l.b16 %v987
    %v1581 = vunpack.c.l.b16 %v988
    %v1582 = vunpack.c.l.b16 %v989
    %v1583 = vunpack.c.l.b16 %v990
    %v1584 = vunpack.c.l.b16 %v991
    %v1585 = vunpack.c.l.b16 %v992
    %v1586 = vunpack.c.l.b16 %v993
    %v1587 = vunpack.c.l.b16 %v994
    %v1588 = vunpack.c.l.b16 %v995
    %v1589 = vunpack.c.l.b16 %v996
    %v1590 = vunpack.c.l.b16 %v997
    %v1591 = vunpack.c.l.b16 %v998
    %v1592 = vunpack.c.l.b16 %v999
    %v1593 = vunpack.c.l.b16 %v1000
    %v1594 = vunpack.c.l.b16 %v1001
    %v1595 = vunpack.c.l.b16 %v1002
    %v1596 = vunpack.c.l.b16 %v1003
    %v1597 = vunpack.c.l.b16 %v1004
    %v1598 = vunpack.c.l.b16 %v1005
    %v1599 = vunpack.c.l.b16 %v1006
    %v1600 = vunpack.c.l.b16 %v1007
    %v1601 = vunpack.c.l.b16 %v1008
    %v1602 = vunpack.c.l.b16 %v1009
    %v1603 = vunpack.c.l.b16 %v1010
    %v1604 = vunpack.c.l.b16 %v1011
    %v1605 = vunpack.c.l.b16 %v1012
    %v1606 = vunpack.c.l.b16 %v1013
    %v1607 = vunpack.c.l.b16 %v1014
    %v1608 = vunpack.c.l.b16 %v1015
    %v1609 = vunpack.c.l.b16 %v1016
    %v1610 = vunpack.c.l.b16 %v1017
    %v1611 = vunpack.c.l.b16 %v1018
    %v1612 = vunpack.c.l.b16 %v1019
    %v1613 = vunpack.c.l.b16 %v1020
    %v1614 = vunpack.c.l.b16 %v1021
    %v1615 = vunpack.c.l.b16 %v1022
    %v1616 = vunpack.c.l.b16 %v1023
    %v1617 = vunpack.c.l.b16 %v1024
    %v1618 = vunpack.c.l.b16 %v1025
    %v1619 = vunpack.c.l.b16 %v1026
    %v1620 = vunpack.c.l.b16 %v1027
    %v1621 = vunpack.c.l.b16 %v1028
    %v1622 = vunpack.c.l.b16 %v1029
    %v1623 = vunpack.c.l.b16 %v1030
    %v1624 = vunpack.c.l.b16 %v1031
    %v1625 = vunpack.c.l.b16 %v1032
    %v1626 = vunpack.c.l.b16 %v1033
    %v1627 = vunpack.c.l.b16 %v1034
    %v1628 = vunpack.c.l.b16 %v1035
    %v1629 = vunpack.c.l.b16 %v1036
    %v1630 = vunpack.c.l.b16 %v1037
    %v1631 = vunpack.c.l.b16 %v1038
    %v1632 = vunpack.c.l.b16 %v1039
    %v1633 = vunpack.c.l.b16 %v1040
    %v1634 = vunpack.c.l.b16 %v1041
    %v1635 = vunpack.c.l.b16 %v1042
    %v1636 = vunpack.c.l.b16 %v1043
    %v1637 = vunpack.c.l.b16 %v1044
    %v1638 = vunpack.c.l.b16 %v1045
    %v1639 = vunpack.c.l.b16 %v1046
    %v1640 = vunpack.c.l.b16 %v1047
    %v1641 = vunpack.c.l.b16 %v1048
    %v1642 = vunpack.c.l.b16 %v1049
    %v1643 = vunpack.c.l.b16 %v1050
    %v1644 = vunpack.c.l.b16 %v1051
    %v1645 = vunpack.c.l.b16 %v1052
    %v1646 = vunpack.c.l.b16 %v1053
    %v1647 = vunpack.c.l.b16 %v1054
    %v1648 = vunpack.c.l.b16 %v1055
    %v1649 = vunpack.c.l.b16 %v1056
    %v1650 = vunpack.c.l.b16 %v1057
    %v1651 = vunpack.c.l.b16 %v1058
    %v1652 = vunpack.c.l.b16 %v1059
    %v1653 = vunpack.c.l.b16 %v1060
    %v1654 = vunpack.c.l.b16 %v1061
    %v1655 = vunpack.c.l.b16 %v1062
    %v1656 = vunpack.c.l.b16 %v1063
    %v1657 = vunpack.c.l.b16 %v1064
    %v1658 = vunpack.c.l.b16 %v1065
    %v1659 = vunpack.c.l.b16 %v1066
    %v1660 = vunpack.c.l.b16 %v1067
    %v1661 = vunpack.c.l.b16 %v1068
    %v1662 = vunpack.c.l.b16 %v1069
    %v1663 = vunpack.c.l.b16 %v1070
    %v1664 = vunpack.c.l.b16 %v1071
    %v1665 = vunpack.c.l.b16 %v1072
    %v1666 = vunpack.c.l.b16 %v1073
    %v1667 = vunpack.c.l.b16 %v1074
    %v1668 = vunpack.c.l.b16 %v1075
    %v1669 = vunpack.c.l.b16 %v1076
    %v1670 = vunpack.c.l.b16 %v1077
    %v1671 = vunpack.c.l.b16 %v1078
    %v1672 = vunpack.c.l.b16 %v1079
    %v1673 = vunpack.c.l.b16 %v1080
    %v1674 = vunpack.c.l.b16 %v1081
    %v1675 = vunpack.c.l.b16 %v1082
    %v1676 = vunpack.c.l.b16 %v1083
    %v1677 = vunpack.c.l.b16 %v1084
    %v1678 = vunpack.c.l.b16 %v1085
    %v1679 = vunpack.c.l.b16 %v1086
    %v1680 = vunpack.c.l.b16 %v1087
    %v1681 = vunpack.c.l.b16 %v1088
    %v1682 = vunpack.c.l.b16 %v1089
    %v1683 = vunpack.c.l.b16 %v1090
    %v1684 = vunpack.c.l.b16 %v1091
    %v1685 = vunpack.c.l.b16 %v1092
    %v1686 = vunpack.c.l.b16 %v1093
    %v1687 = vunpack.c.l.b16 %v1094
    %v1688 = vunpack.c.l.b16 %v1095
    %v1689 = vunpack.c.l.b16 %v1096
    %v1690 = vpack.c.b16 %v1451, %v1450
    %v1691 = vpack.c.b16 %v1453, %v1452
    %v1692 = vpack.c.b16 %v1455, %v1454
    %v1693 = vpack.c.b16 %v1457, %v1456
    %v1694 = vpack.c.b16 %v1459, %v1458
    %v1695 = vpack.c.b16 %v1461, %v1460
    %v1696 = vpack.c.b16 %v1463, %v1462
    %v1697 = vpack.c.b16 %v1465, %v1464
    %v1698 = vpack.c.b16 %v1467, %v1466
    %v1699 = vpack.c.b16 %v1469, %v1468
    %v1700 = vpack.c.b16 %v1471, %v1470
    %v1701 = vpack.c.b16 %v1473, %v1472
    %v1702 = vpack.c.b16 %v1475, %v1474
    %v1703 = vpack.c.b16 %v1477, %v1476
    %v1704 = vpack.c.b16 %v1479, %v1478
    %v1705 = vpack.c.b16 %v1481, %v1480
    %v1706 = vpack.c.b16 %v1483, %v1482
    %v1707 = vpack.c.b16 %v1485, %v1484
    %v1708 = vpack.c.b16 %v1487, %v1486
    %v1709 = vpack.c.b16 %v1489, %v1488
    %v1710 = vpack.c.b16 %v1491, %v1490
    %v1711 = vpack.c.b16 %v1493, %v1492
    %v1712 = vpack.c.b16 %v1495, %v1494
    %v1713 = vpack.c.b16 %v1497, %v1496
    %v1714 = vpack.c.b16 %v1499, %v1498
    %v1715 = vpack.c.b16 %v1501, %v1500
    %v1716 = vpack.c.b16 %v1503, %v1502
    %v1717 = vpack.c.b16 %v1505, %v1504
    %v1718 = vpack.c.b16 %v1507, %v1506
    %v1719 = vpack.c.b16 %v1509, %v1508
    %v1720 = vpack.c.b16 %v1511, %v1510
    %v1721 = vpack.c.b16 %v1513, %v1512
    %v1722 = vpack.c.b16 %v1515, %v1514
    %v1723 = vpack.c.b16 %v1517, %v1516
    %v1724 = vpack.c.b16 %v1519, %v1518
    %v1725 = vpack.c.b16 %v1521, %v1520
    %v1726 = vpack.c.b16 %v1523, %v1522
    %v1727 = vpack.c.b16 %v1525, %v1524
    %v1728 = vpack.c.b16 %v1527, %v1526
    %v1729 = vpack.c.b16 %v1529, %v1528
    %v1730 = vpack.c.b16 %v1531, %v1530
    %v1731 = vpack.c.b16 %v1533, %v1532
    %v1732 = vpack.c.b16 %v1535, %v1534
    %v1733 = vpack.c.b16 %v1537, %v1536
    %v1734 = vpack.c.b16 %v1539, %v1538
    %v1735 = vpack.c.b16 %v1541, %v1540
    %v1736 = vpack.c.b16 %v1543, %v1542
    %v1737 = vpack.c.b16 %v1545, %v1544
    %v1738 = vpack.c.b16 %v1547, %v1546
    %v1739 = vpack.c.b16 %v1549, %v1548
    %v1740 = vpack.c.b16 %v1551, %v1550
    %v1741 = vpack.c.b16 %v1553, %v1552
    %v1742 = vpack.c.b16 %v1555, %v1554
    %v1743 = vpack.c.b16 %v1557, %v1556
    %v1744 = vpack.c.b16 %v1559, %v1558
    %v1745 = vpack.c.b16 %v1561, %v1560
    %v1746 = vpack.c.b16 %v1563, %v1562
    %v1747 = vpack.c.b16 %v1565, %v1564
    %v1748 = vpack.c.b16 %v1567, %v1566
    %v1749 = vpack.c.b16 %v1569, %v1568
    %v1750 = vpack.c.b16 %v1571, %v1570
    %v1751 = vpack.c.b16 %v1573, %v1572
    %v1752 = vpack.c.b16 %v1575, %v1574
    %v1753 = vpack.c.b16 %v1577, %v1576
    %v1754 = vpack.c.b16 %v1579, %v1578
    %v1755 = vpack.c.b16 %v1581, %v1580
    %v1756 = vpack.c.b16 %v1583, %v1582
    %v1757 = vpack.c.b16 %v1585, %v1584
    %v1758 = vpack.c.b16 %v1587, %v1586
    %v1759 = vpack.c.b16 %v1589, %v1588
    %v1760 = vpack.c.b16 %v1591, %v1590
    %v1761 = vpack.c.b16 %v1593, %v1592
    %v1762 = vpack.c.b16 %v1595, %v1594
    %v1763 = vpack.c.b16 %v1597, %v1596
    %v1764 = vpack.c.b16 %v1599, %v1598
    %v1765 = vpack.c.b16 %v1601, %v1600
    %v1766 = vpack.c.b16 %v1603, %v1602
    %v1767 = vpack.c.b16 %v1605, %v1604
    %v1768 = vpack.c.b16 %v1607, %v1606
    %v1769 = vpack.c.b16 %v1609, %v1608
    %v1770 = vpack.c.b16 %v1611, %v1610
    %v1771 = vpack.c.b16 %v1613, %v1612
    %v1772 = vpack.c.b16 %v1615, %v1614
    %v1773 = vpack.c.b16 %v1617, %v1616
    %v1774 = vpack.c.b16 %v1619, %v1618
    %v1775 = vpack.c.b16 %v1621, %v1620
    %v1776 = vpack.c.b16 %v1623, %v1622
    %v1777 = vpack.c.b16 %v1625, %v1624
    %v1778 = vpack.c.b16 %v1627, %v1626
    %v1779 = vpack.c.b16 %v1629, %v1628
    %v1780 = vpack.c.b16 %v1631, %v1630
    %v1781 = vpack.c.b16 %v1633, %v1632
    %v1782 = vpack.c.b16 %v1635, %v1634
    %v1783 = vpack.c.b16 %v1637, %v1636
    %v1784 = vpack.c.b16 %v1639, %v1638
    %v1785 = vpack.c.b16 %v1641, %v1640
    %v1786 = vpack.c.b16 %v1643, %v1642
    %v1787 = vpack.c.b16 %v1645, %v1644
    %v1788 = vpack.c.b16 %v1647, %v1646
    %v1789 = vpack.c.b16 %v1649, %v1648
    %v1790 = vpack.c.b16 %v1651, %v1650
    %v1791 = vpack.c.b16 %v1653, %v1652
    %v1792 = vpack.c.b16 %v1655, %v1654
    %v1793 = vpack.c.b16 %v1657, %v1656
    %v1794 = vpack.c.b16 %v1659, %v1658
    %v1795 = vpack.c.b16 %v1661, %v1660
    %v1796 = vpack.c.b16 %v1663, %v1662
    %v1797 = vpack.c.b16 %v1665, %v1664
    %v1798 = vpack.c.b16 %v1667, %v1666
    %v1799 = vpack.c.b16 %v1669, %v1668
    %v1800 = vpack.c.b16 %v1671, %v1670
    %v1801 = vpack.c.b16 %v1673, %v1672
    %v1802 = vpack.c.b16 %v1675, %v1674
    %v1803 = vpack.c.b16 %v1677, %v1676
    %v1804 = vpack.c.b16 %v1679, %v1678
    %v1805 = vpack.c.b16 %v1681, %v1680
    %v1806 = vpack.c.b16 %v1683, %v1682
    %v1807 = vpack.c.b16 %v1685, %v1684
    %v1808 = vpack.c.b16 %v1687, %v1686
    %v1809 = vpack.c.b16 %v1689, %v1688
    %1930 = vmatprep.subr.bf16.mxu0 0
    %1931 = vmatpush1.bf16.msra.mxu0 %v1690
    %1932 = vmatprep.subr.bf16.mxu0 0
    %1933 = vmatpush1.bf16.msra.mxu0 %v1691
    %1934 = vmatprep.subr.bf16.mxu0 0
    %1935 = vmatpush1.bf16.msra.mxu0 %v1692
    %1936 = vmatprep.subr.bf16.mxu0 0
    %1937 = vmatpush1.bf16.msra.mxu0 %v1693
    %1938 = vmatprep.subr.bf16.mxu0 0
    %1939 = vmatpush1.bf16.msra.mxu0 %v1694
    %1940 = vmatprep.subr.bf16.mxu0 0
    %1941 = vmatpush1.bf16.msra.mxu0 %v1695
    %1942 = vmatprep.subr.bf16.mxu0 0
    %1943 = vmatpush1.bf16.msra.mxu0 %v1696
    %1944 = vmatprep.subr.bf16.mxu0 0
    %1945 = vmatpush1.bf16.msra.mxu0 %v1697
    %1946 = vmatprep.subr.bf16.mxu0 0
    %1947 = vmatpush1.bf16.msra.mxu0 %v1698
    %1948 = vmatprep.subr.bf16.mxu0 0
    %1949 = vmatpush1.bf16.msra.mxu0 %v1699
    %1950 = vmatprep.subr.bf16.mxu0 0
    %1951 = vmatpush1.bf16.msra.mxu0 %v1700
    %1952 = vmatprep.subr.bf16.mxu0 0
    %1953 = vmatpush1.bf16.msra.mxu0 %v1701
    %1954 = vmatprep.subr.bf16.mxu0 0
    %1955 = vmatpush1.bf16.msra.mxu0 %v1702
    %1956 = vmatprep.subr.bf16.mxu0 0
    %1957 = vmatpush1.bf16.msra.mxu0 %v1703
    %1958 = vmatprep.subr.bf16.mxu0 0
    %1959 = vmatpush1.bf16.msra.mxu0 %v1704
    %1960 = vmatprep.subr.bf16.mxu0 0
    %1961 = vmatpush1.bf16.msra.mxu0 %v1705
    %1962 = vmatprep.mubr.bf16.mxu0 %v1181
    %1963 = vmatmul.mubr.bf16.gmra.mrb[0].mxu0 %v1180
    %v1964 = vpop.f32.mrb[0].mxu0
    %v1965 = vadd.f32 %v1102, %v1964
    %v1966 = vpop.f32.mrb[0].mxu0
    %v1967 = vpop.f32.mrb[0].mxu0
    %v1968 = vpop.f32.mrb[0].mxu0
    %1969 = vdwg.mxu0
    %1970 = vmatprep.subr.bf16.mxu0 0
    %1971 = vmatpush1.bf16.msra.mxu0 %v1706
    %1972 = vmatprep.subr.bf16.mxu0 0
    %1973 = vmatpush1.bf16.msra.mxu0 %v1707
    %1974 = vmatprep.subr.bf16.mxu0 0
    %1975 = vmatpush1.bf16.msra.mxu0 %v1708
    %1976 = vmatprep.subr.bf16.mxu0 0
    %1977 = vmatpush1.bf16.msra.mxu0 %v1709
    %1978 = vmatprep.subr.bf16.mxu0 0
    %1979 = vmatpush1.bf16.msra.mxu0 %v1710
    %1980 = vmatprep.subr.bf16.mxu0 0
    %1981 = vmatpush1.bf16.msra.mxu0 %v1711
    %1982 = vmatprep.subr.bf16.mxu0 0
    %1983 = vmatpush1.bf16.msra.mxu0 %v1712
    %1984 = vmatprep.subr.bf16.mxu0 0
    %1985 = vmatpush1.bf16.msra.mxu0 %v1713
    %1986 = vmatprep.subr.bf16.mxu0 0
    %1987 = vmatpush1.bf16.msra.mxu0 %v1714
    %1988 = vmatprep.subr.bf16.mxu0 0
    %1989 = vmatpush1.bf16.msra.mxu0 %v1715
    %1990 = vmatprep.subr.bf16.mxu0 0
    %1991 = vmatpush1.bf16.msra.mxu0 %v1716
    %1992 = vmatprep.subr.bf16.mxu0 0
    %1993 = vmatpush1.bf16.msra.mxu0 %v1717
    %1994 = vmatprep.subr.bf16.mxu0 0
    %1995 = vmatpush1.bf16.msra.mxu0 %v1718
    %1996 = vmatprep.subr.bf16.mxu0 0
    %1997 = vmatpush1.bf16.msra.mxu0 %v1719
    %1998 = vmatprep.subr.bf16.mxu0 0
    %1999 = vmatpush1.bf16.msra.mxu0 %v1720
    %2000 = vmatprep.subr.bf16.mxu0 0
    %2001 = vmatpush1.bf16.msra.mxu0 %v1721
    %2002 = vmatprep.mubr.bf16.mxu0 %v1183
    %2003 = vmatmul.mubr.bf16.gmra.mrb[0].mxu0 %v1182
    %v2004 = vpop.f32.mrb[0].mxu0
    %v2005 = vadd.f32 %v1965, %v2004
    %v2006 = vpop.f32.mrb[0].mxu0
    %v2007 = vpop.f32.mrb[0].mxu0
    %v2008 = vpop.f32.mrb[0].mxu0
    %2009 = vdwg.mxu0
    %2010 = vmatprep.subr.bf16.mxu0 0
    %2011 = vmatpush1.bf16.msra.mxu0 %v1722
    %2012 = vmatprep.subr.bf16.mxu0 0
    %2013 = vmatpush1.bf16.msra.mxu0 %v1723
    %2014 = vmatprep.subr.bf16.mxu0 0
    %2015 = vmatpush1.bf16.msra.mxu0 %v1724
    %2016 = vmatprep.subr.bf16.mxu0 0
    %2017 = vmatpush1.bf16.msra.mxu0 %v1725
    %2018 = vmatprep.subr.bf16.mxu0 0
    %2019 = vmatpush1.bf16.msra.mxu0 %v1726
    %2020 = vmatprep.subr.bf16.mxu0 0
    %2021 = vmatpush1.bf16.msra.mxu0 %v1727
    %2022 = vmatprep.subr.bf16.mxu0 0
    %2023 = vmatpush1.bf16.msra.mxu0 %v1728
    %2024 = vmatprep.subr.bf16.mxu0 0
    %2025 = vmatpush1.bf16.msra.mxu0 %v1729
    %2026 = vmatprep.subr.bf16.mxu0 0
    %2027 = vmatpush1.bf16.msra.mxu0 %v1730
    %2028 = vmatprep.subr.bf16.mxu0 0
    %2029 = vmatpush1.bf16.msra.mxu0 %v1731
    %2030 = vmatprep.subr.bf16.mxu0 0
    %2031 = vmatpush1.bf16.msra.mxu0 %v1732
    %2032 = vmatprep.subr.bf16.mxu0 0
    %2033 = vmatpush1.bf16.msra.mxu0 %v1733
    %2034 = vmatprep.subr.bf16.mxu0 0
    %2035 = vmatpush1.bf16.msra.mxu0 %v1734
    %2036 = vmatprep.subr.bf16.mxu0 0
    %2037 = vmatpush1.bf16.msra.mxu0 %v1735
    %2038 = vmatprep.subr.bf16.mxu0 0
    %2039 = vmatpush1.bf16.msra.mxu0 %v1736
    %2040 = vmatprep.subr.bf16.mxu0 0
    %2041 = vmatpush1.bf16.msra.mxu0 %v1737
    %2042 = vmatprep.mubr.bf16.mxu0 %v1185
    %2043 = vmatmul.mubr.bf16.gmra.mrb[0].mxu0 %v1184
    %v2044 = vpop.f32.mrb[0].mxu0
    %v2045 = vadd.f32 %v2005, %v2044
    %v2046 = vpop.f32.mrb[0].mxu0
    %v2047 = vpop.f32.mrb[0].mxu0
    %v2048 = vpop.f32.mrb[0].mxu0
    %2049 = vdwg.mxu0
    %2050 = vmatprep.subr.bf16.mxu0 0
    %2051 = vmatpush1.bf16.msra.mxu0 %v1738
    %2052 = vmatprep.subr.bf16.mxu0 0
    %2053 = vmatpush1.bf16.msra.mxu0 %v1739
    %2054 = vmatprep.subr.bf16.mxu0 0
    %2055 = vmatpush1.bf16.msra.mxu0 %v1740
    %2056 = vmatprep.subr.bf16.mxu0 0
    %2057 = vmatpush1.bf16.msra.mxu0 %v1741
    %2058 = vmatprep.subr.bf16.mxu0 0
    %2059 = vmatpush1.bf16.msra.mxu0 %v1742
    %2060 = vmatprep.subr.bf16.mxu0 0
    %2061 = vmatpush1.bf16.msra.mxu0 %v1743
    %2062 = vmatprep.subr.bf16.mxu0 0
    %2063 = vmatpush1.bf16.msra.mxu0 %v1744
    %2064 = vmatprep.subr.bf16.mxu0 0
    %2065 = vmatpush1.bf16.msra.mxu0 %v1745
    %2066 = vmatprep.subr.bf16.mxu0 0
    %2067 = vmatpush1.bf16.msra.mxu0 %v1746
    %2068 = vmatprep.subr.bf16.mxu0 0
    %2069 = vmatpush1.bf16.msra.mxu0 %v1747
    %2070 = vmatprep.subr.bf16.mxu0 0
    %2071 = vmatpush1.bf16.msra.mxu0 %v1748
    %2072 = vmatprep.subr.bf16.mxu0 0
    %2073 = vmatpush1.bf16.msra.mxu0 %v1749
    %2074 = vmatprep.subr.bf16.mxu0 0
    %2075 = vmatpush1.bf16.msra.mxu0 %v1750
    %2076 = vmatprep.subr.bf16.mxu0 0
    %2077 = vmatpush1.bf16.msra.mxu0 %v1751
    %2078 = vmatprep.subr.bf16.mxu0 0
    %2079 = vmatpush1.bf16.msra.mxu0 %v1752
    %2080 = vmatprep.subr.bf16.mxu0 0
    %2081 = vmatpush1.bf16.msra.mxu0 %v1753
    %2082 = vmatprep.mubr.bf16.mxu0 %v1187
    %2083 = vmatmul.mubr.bf16.gmra.mrb[0].mxu0 %v1186
    %v2084 = vpop.f32.mrb[0].mxu0
    %v2085 = vadd.f32 %v2045, %v2084
    %v2086 = vpop.f32.mrb[0].mxu0
    %v2087 = vpop.f32.mrb[0].mxu0
    %v2088 = vpop.f32.mrb[0].mxu0
    %2089 = vdwg.mxu0
    %2090 = vmatprep.subr.bf16.mxu0 0
    %2091 = vmatpush1.bf16.msra.mxu0 %v1754
    %2092 = vmatprep.subr.bf16.mxu0 0
    %2093 = vmatpush1.bf16.msra.mxu0 %v1755
    %2094 = vmatprep.subr.bf16.mxu0 0
    %2095 = vmatpush1.bf16.msra.mxu0 %v1756
    %2096 = vmatprep.subr.bf16.mxu0 0
    %2097 = vmatpush1.bf16.msra.mxu0 %v1757
    %2098 = vmatprep.subr.bf16.mxu0 0
    %2099 = vmatpush1.bf16.msra.mxu0 %v1758
    %2100 = vmatprep.subr.bf16.mxu0 0
    %2101 = vmatpush1.bf16.msra.mxu0 %v1759
    %2102 = vmatprep.subr.bf16.mxu0 0
    %2103 = vmatpush1.bf16.msra.mxu0 %v1760
    %2104 = vmatprep.subr.bf16.mxu0 0
    %2105 = vmatpush1.bf16.msra.mxu0 %v1761
    %2106 = vmatprep.subr.bf16.mxu0 0
    %2107 = vmatpush1.bf16.msra.mxu0 %v1762
    %2108 = vmatprep.subr.bf16.mxu0 0
    %2109 = vmatpush1.bf16.msra.mxu0 %v1763
    %2110 = vmatprep.subr.bf16.mxu0 0
    %2111 = vmatpush1.bf16.msra.mxu0 %v1764
    %2112 = vmatprep.subr.bf16.mxu0 0
    %2113 = vmatpush1.bf16.msra.mxu0 %v1765
    %2114 = vmatprep.subr.bf16.mxu0 0
    %2115 = vmatpush1.bf16.msra.mxu0 %v1766
    %2116 = vmatprep.subr.bf16.mxu0 0
    %2117 = vmatpush1.bf16.msra.mxu0 %v1767
    %2118 = vmatprep.subr.bf16.mxu0 0
    %2119 = vmatpush1.bf16.msra.mxu0 %v1768
    %2120 = vmatprep.subr.bf16.mxu0 0
    %2121 = vmatpush1.bf16.msra.mxu0 %v1769
    %2122 = vmatprep.mubr.bf16.mxu0 %v1189
    %2123 = vmatmul.mubr.bf16.gmra.mrb[0].mxu0 %v1188
    %v2124 = vpop.f32.mrb[0].mxu0
    %v2125 = vadd.f32 %v2085, %v2124
    %v2126 = vpop.f32.mrb[0].mxu0
    %v2127 = vpop.f32.mrb[0].mxu0
    %v2128 = vpop.f32.mrb[0].mxu0
    %2129 = vdwg.mxu0
    %2130 = vmatprep.subr.bf16.mxu0 0
    %2131 = vmatpush1.bf16.msra.mxu0 %v1770
    %2132 = vmatprep.subr.bf16.mxu0 0
    %2133 = vmatpush1.bf16.msra.mxu0 %v1771
    %2134 = vmatprep.subr.bf16.mxu0 0
    %2135 = vmatpush1.bf16.msra.mxu0 %v1772
    %2136 = vmatprep.subr.bf16.mxu0 0
    %2137 = vmatpush1.bf16.msra.mxu0 %v1773
    %2138 = vmatprep.subr.bf16.mxu0 0
    %2139 = vmatpush1.bf16.msra.mxu0 %v1774
    %2140 = vmatprep.subr.bf16.mxu0 0
    %2141 = vmatpush1.bf16.msra.mxu0 %v1775
    %2142 = vmatprep.subr.bf16.mxu0 0
    %2143 = vmatpush1.bf16.msra.mxu0 %v1776
    %2144 = vmatprep.subr.bf16.mxu0 0
    %2145 = vmatpush1.bf16.msra.mxu0 %v1777
    %2146 = vmatprep.subr.bf16.mxu0 0
    %2147 = vmatpush1.bf16.msra.mxu0 %v1778
    %2148 = vmatprep.subr.bf16.mxu0 0
    %2149 = vmatpush1.bf16.msra.mxu0 %v1779
    %2150 = vmatprep.subr.bf16.mxu0 0
    %2151 = vmatpush1.bf16.msra.mxu0 %v1780
    %2152 = vmatprep.subr.bf16.mxu0 0
    %2153 = vmatpush1.bf16.msra.mxu0 %v1781
    %2154 = vmatprep.subr.bf16.mxu0 0
    %2155 = vmatpush1.bf16.msra.mxu0 %v1782
    %2156 = vmatprep.subr.bf16.mxu0 0
    %2157 = vmatpush1.bf16.msra.mxu0 %v1783
    %2158 = vmatprep.subr.bf16.mxu0 0
    %2159 = vmatpush1.bf16.msra.mxu0 %v1784
    %2160 = vmatprep.subr.bf16.mxu0 0
    %2161 = vmatpush1.bf16.msra.mxu0 %v1785
    %2162 = vmatprep.mubr.bf16.mxu0 %v1191
    %2163 = vmatmul.mubr.bf16.gmra.mrb[0].mxu0 %v1190
    %v2164 = vpop.f32.mrb[0].mxu0
    %v2165 = vadd.f32 %v2125, %v2164
    %v2166 = vpop.f32.mrb[0].mxu0
    %v2167 = vpop.f32.mrb[0].mxu0
    %v2168 = vpop.f32.mrb[0].mxu0
    %2169 = vdwg.mxu0
    %2170 = vmatprep.subr.bf16.mxu0 0
    %2171 = vmatpush1.bf16.msra.mxu0 %v1786
    %2172 = vmatprep.subr.bf16.mxu0 0
    %2173 = vmatpush1.bf16.msra.mxu0 %v1787
    %2174 = vmatprep.subr.bf16.mxu0 0
    %2175 = vmatpush1.bf16.msra.mxu0 %v1788
    %2176 = vmatprep.subr.bf16.mxu0 0
    %2177 = vmatpush1.bf16.msra.mxu0 %v1789
    %2178 = vmatprep.subr.bf16.mxu0 0
    %2179 = vmatpush1.bf16.msra.mxu0 %v1790
    %2180 = vmatprep.subr.bf16.mxu0 0
    %2181 = vmatpush1.bf16.msra.mxu0 %v1791
    %2182 = vmatprep.subr.bf16.mxu0 0
    %2183 = vmatpush1.bf16.msra.mxu0 %v1792
    %2184 = vmatprep.subr.bf16.mxu0 0
    %2185 = vmatpush1.bf16.msra.mxu0 %v1793
    %2186 = vmatprep.subr.bf16.mxu0 0
    %2187 = vmatpush1.bf16.msra.mxu0 %v1794
    %2188 = vmatprep.subr.bf16.mxu0 0
    %2189 = vmatpush1.bf16.msra.mxu0 %v1795
    %2190 = vmatprep.subr.bf16.mxu0 0
    %2191 = vmatpush1.bf16.msra.mxu0 %v1796
    %2192 = vmatprep.subr.bf16.mxu0 0
    %2193 = vmatpush1.bf16.msra.mxu0 %v1797
    %2194 = vmatprep.subr.bf16.mxu0 0
    %2195 = vmatpush1.bf16.msra.mxu0 %v1798
    %2196 = vmatprep.subr.bf16.mxu0 0
    %2197 = vmatpush1.bf16.msra.mxu0 %v1799
    %2198 = vmatprep.subr.bf16.mxu0 0
    %2199 = vmatpush1.bf16.msra.mxu0 %v1800
    %2200 = vmatprep.subr.bf16.mxu0 0
    %2201 = vmatpush1.bf16.msra.mxu0 %v1801
    %2202 = vmatprep.mubr.bf16.mxu0 %v1193
    %2203 = vmatmul.mubr.bf16.gmra.mrb[0].mxu0 %v1192
    %v2204 = vpop.f32.mrb[0].mxu0
    %v2205 = vadd.f32 %v2165, %v2204
    %v2206 = vpop.f32.mrb[0].mxu0
    %v2207 = vpop.f32.mrb[0].mxu0
    %v2208 = vpop.f32.mrb[0].mxu0
    %2209 = vdwg.mxu0
    %2210 = vmatprep.subr.bf16.mxu0 0
    %2211 = vmatpush1.bf16.msra.mxu0 %v1802
    %2212 = vmatprep.subr.bf16.mxu0 0
    %2213 = vmatpush1.bf16.msra.mxu0 %v1803
    %2214 = vmatprep.subr.bf16.mxu0 0
    %2215 = vmatpush1.bf16.msra.mxu0 %v1804
    %2216 = vmatprep.subr.bf16.mxu0 0
    %2217 = vmatpush1.bf16.msra.mxu0 %v1805
    %2218 = vmatprep.subr.bf16.mxu0 0
    %2219 = vmatpush1.bf16.msra.mxu0 %v1806
    %2220 = vmatprep.subr.bf16.mxu0 0
    %2221 = vmatpush1.bf16.msra.mxu0 %v1807
    %2222 = vmatprep.subr.bf16.mxu0 0
    %2223 = vmatpush1.bf16.msra.mxu0 %v1808
    %2224 = vmatprep.subr.bf16.mxu0 0
    %2225 = vmatpush1.bf16.msra.mxu0 %v1809
    %2226 = vmatprep.subr.bf16.mxu0 0
    %2227 = vmatpush1.bf16.msra.mxu0 0
    %2228 = vmatprep.subr.bf16.mxu0 0
    %2229 = vmatpush1.bf16.msra.mxu0 0
    %2230 = vmatprep.subr.bf16.mxu0 0
    %2231 = vmatpush1.bf16.msra.mxu0 0
    %2232 = vmatprep.subr.bf16.mxu0 0
    %2233 = vmatpush1.bf16.msra.mxu0 0
    %2234 = vmatprep.subr.bf16.mxu0 0
    %2235 = vmatpush1.bf16.msra.mxu0 0
    %2236 = vmatprep.subr.bf16.mxu0 0
    %2237 = vmatpush1.bf16.msra.mxu0 0
    %2238 = vmatprep.subr.bf16.mxu0 0
    %2239 = vmatpush1.bf16.msra.mxu0 0
    %2240 = vmatprep.subr.bf16.mxu0 0
    %2241 = vmatpush1.bf16.msra.mxu0 0
    %2242 = vmatprep.mubr.bf16.mxu0 0
    %2243 = vmatmul.mubr.bf16.gmra.mrb[0].mxu0 %v1194
    %v2244 = vpop.f32.mrb[0].mxu0
    %v2245 = vadd.f32 %v2205, %v2244
    %v2246 = vpop.f32.mrb[0].mxu0
    %v2247 = vpop.f32.mrb[0].mxu0
    %v2248 = vpop.f32.mrb[0].mxu0
    %2249 = vdwg.mxu0
    %2250 = vst [vmem:[#allocation2] sm:$0x3] %v2245
    // Predicated region
    $region14: #{tpu_custom_call.1} parent=1 // pred_check
      _
    $region15: #{tpu_custom_call.1} parent=1 // pred_check_branch
      %2252 = sbr.rel (0) target = $region17
    $region16: #{tpu_custom_call.1} parent=1 // pred_region
      %s2254 = ssub.s32 32, 32
      %2255 = vsyncadd [#allocation3], %s2254
      %s2257 = sshll.u32 [#allocation2], 4
      %s2258 = int_to_ptr.vmem [resolvable:$true] %s2257
      %2260 = dma.vmem_to_hbm [thread:$0]  %s2258, 32, %s3, [#allocation3]
    $region17: #{tpu_custom_call.1} parent=1 // pred_fallthru
      _
    // Predicated region
    $region18: #{tpu_custom_call.1} parent=1 // pred_check
      _
    $region19: #{tpu_custom_call.1} parent=1 // pred_check_branch
      %2262 = sbr.rel (0) target = $region21
    $region20: #{tpu_custom_call.1} parent=1 // pred_region
      %2263 = dma.done [#allocation3], 32
    $region21: #{tpu_custom_call.1} parent=1 // pred_fallthru
      _
    %2264 = vsyncpa [#allocation3], 1

</llo_original>
